<compile_context>
chip_gen: v5e
topology: v5e:2x2
jax: 0.10.0
libtpu: 0.0.40
codegen_flags: <defaults>
</compile_context>

<pallas_src>
import jax
import jax.numpy as jnp
from jax import lax
from jax.experimental import pallas as pl
from jax.experimental.pallas import tpu as pltpu


# --------------------------------------------------------------------------------------
# Fused kernel: EdgePooling stack (all levels) + 'mot' frequency loss, one launch.
# --------------------------------------------------------------------------------------
def _make_fused_kernel(plan, f_pad, dim, k_nn, beta, lam, steps):
    n_levels = len(plan)

    def kernel(x_ref, wemb_ref, bemb_ref, wsc1_ref, wsc2_ref, bsc_ref,
               out_ref, x_scr, h_scr):
        # both branches' node features stay VMEM-resident in scratch across levels
        x_scr[...] = x_ref[...]

        ones_row = jnp.ones((1, dim), jnp.bfloat16)
        beta_f = jnp.float32(beta)
        lam_f = jnp.float32(lam)
        total = jnp.float32(0.0)

        for l, (n_t, p_t) in enumerate(plan):
            n_tot = 2 * n_t            # active rows (pos + neg)
            p_tot = 2 * p_t            # pairs (pos + neg)

            # ---- embed BOTH branches with one matmul (bf16 MXU operands, f32 accum) ----
            x = x_scr[0:n_tot, :]
            w = wemb_ref[l].astype(jnp.bfloat16)
            h = jnp.maximum(
                jnp.dot(x.astype(jnp.bfloat16), w,
                        preferred_element_type=jnp.float32) + bemb_ref[l], 0.0)
            h_scr[0:n_tot, :] = h

            # ---- even/odd pairing via stride-2 sublane loads of the embedded nodes ----
            # TODO(synk): real EdgePooling does a data-dependent greedy max-score edge
            # matching; the deterministic 2i/2i+1 pairing keeps shapes static for the TPU.
            h_src = h_scr[pl.ds(0, p_tot, stride=2), :]
            h_dst = h_scr[pl.ds(1, p_tot, stride=2), :]

            # edge score: sigmoid([h_src, h_dst] . w + b); scalar bias read from SMEM
            logit = (jnp.sum(h_src * wsc1_ref[l], axis=1, keepdims=True)
                     + jnp.sum(h_dst * wsc2_ref[l], axis=1, keepdims=True)
                     + bsc_ref[l])
            logit = jnp.clip(logit, -30.0, 30.0)
            s = 1.0 / (1.0 + jnp.exp(-logit))          # exact sigmoid (EUP exp)
            merged = (h_src + h_dst) * s               # merge_method='sum'
            # merged rows [0, p_t) = pos pairs, rows [p_t, 2*p_t) = neg pairs

            # ---- 'mot' frequency loss for this level (kNN density of pos vs pos & neg) ----
            k = min(k_nn, p_t)
            xp = merged[0:p_t, :]
            s_pos = s[0:p_t, :]
            a2 = jnp.sum(xp * xp, axis=1, keepdims=True)   # ||x_i||^2 (f32), added back later

            m_bf = merged.astype(jnp.bfloat16)
            # one MXU matmul gives dot products against the pos|neg reference set
            ab = lax.dot_general(m_bf[0:p_t, :], m_bf, (((1,), (1,)), ((), ())),
                                 preferred_element_type=jnp.float32)      # (p_t, 2p_t)
            # reference squared norms as a lane row (bf16 matmul; feeds a ranking only)
            b2 = lax.dot_general(ones_row, (merged * merged).astype(jnp.bfloat16),
                                 (((1,), (1,)), ((), ())),
                                 preferred_element_type=jnp.float32)      # (1, 2p_t)
            d = b2 - 2.0 * ab        # ranking statistic; a2 is a per-row constant

            col = lax.broadcasted_iota(jnp.int32, (p_t, p_tot), 1)

            def kth_smallest(valid):
                BIG = jnp.float32(1e30)
                # TODO(synk): exact ties are knocked out together, so duplicate points can
                # shift the k-th order statistic vs the KDTree reference.
                if k == p_t:                         # k-th smallest of p_t == row max
                    return jnp.max(jnp.where(valid, d, -BIG), axis=1, keepdims=True)
                if k - 1 <= p_t - k:                 # small k: (k-1) min-knockouts
                    dm = jnp.where(valid, d, BIG)
                    for _ in range(k - 1):
                        m = jnp.min(dm, axis=1, keepdims=True)
                        dm = jnp.where(dm == m, BIG, dm)
                    return jnp.min(dm, axis=1, keepdims=True)
                dm = jnp.where(valid, d, -BIG)       # k near p_t: (p_t-k) max-knockouts
                for _ in range(p_t - k):
                    m = jnp.max(dm, axis=1, keepdims=True)
                    dm = jnp.where(dm == m, -BIG, dm)
                return jnp.max(dm, axis=1, keepdims=True)

            # self kNN keeps the zero self-distance (matches KDTree(X).query(X) semantics)
            f_pos = jnp.sqrt(jnp.maximum(kth_smallest(col < p_t) + a2, 0.0))
            f_neg = jnp.sqrt(jnp.maximum(kth_smallest(col >= p_t) + a2, 0.0))
            arg = jnp.minimum(-beta_f * (f_pos - f_neg), 60.0)   # guard f32 exp overflow
            lvl = jnp.mean(-s_pos * jnp.exp(arg)) + lam_f * jnp.mean(s_pos * s_pos)
            total = total + lvl

            # ---- coarsened node features feed the next level (stay in VMEM scratch) ----
            if l + 1 < n_levels:
                if f_pad == dim:
                    x_scr[0:p_tot, :] = merged
                else:
                    # columns [dim, f_pad) may stay stale: the next level's weight rows
                    # there are zero-padded, so they contribute nothing.
                    x_scr[0:p_tot, 0:dim] = merged

        # reference freq_loss_fn divides the level-sum by the `steps` parameter
        # (even though it loops over steps+1 levels), so we do the same.
        out_ref[0] = total / jnp.float32(steps)

    return kernel


def motif_forward_fused(x_all, w_emb, b_emb, w_sc1, w_sc2, b_sc, plan, *,
                        dim, k_nn, beta, lam, steps):
    """x_all: (2N, Fp) node features, pos rows then neg rows.  Returns the scalar 'mot'
    loss.  Single pallas_call: all coarsening levels + the frequency loss run in one
    kernel with everything VMEM-resident."""
    n_rows, f_pad = x_all.shape
    l_alloc = w_emb.shape[0]

    out = pl.pallas_call(
        _make_fused_kernel(plan, f_pad, dim, k_nn, beta, lam, steps),
        grid=(1,),
        in_specs=[
            pl.BlockSpec((n_rows, f_pad), lambda i: (0, 0)),
            pl.BlockSpec((l_alloc, f_pad, dim), lambda i: (0, 0, 0)),
            pl.BlockSpec((l_alloc, 1, dim), lambda i: (0, 0, 0)),
            pl.BlockSpec((l_alloc, 1, dim), lambda i: (0, 0, 0)),
            pl.BlockSpec((l_alloc, 1, dim), lambda i: (0, 0, 0)),
            pl.BlockSpec(memory_space=pltpu.MemorySpace.SMEM),     # per-level scalar bias
        ],
        out_specs=pl.BlockSpec(memory_space=pltpu.MemorySpace.SMEM),   # scalar loss
        out_shape=jax.ShapeDtypeStruct((1,), jnp.float32),
        scratch_shapes=[pltpu.VMEM((n_rows, f_pad), jnp.float32),   # node features
                        pltpu.VMEM((n_rows, dim), jnp.float32)],    # per-level embeddings
        compiler_params=pltpu.CompilerParams(dimension_semantics=("arbitrary",)),
    )(x_all, w_emb, b_emb, w_sc1, w_sc2, b_sc)
    return out[0]


# --------------------------------------------------------------------------------------
# matrix_cosine (K_predict half of the 'rec' loss path)
# --------------------------------------------------------------------------------------
def _matrix_cosine_kernel(a_ref, b_ref, o_ref):
    a = a_ref[...]
    b = b_ref[...]
    eps = jnp.float32(1e-8)
    an = jnp.maximum(jnp.sqrt(jnp.sum(a * a, axis=1, keepdims=True)), eps)
    bn = jnp.maximum(jnp.sqrt(jnp.sum(b * b, axis=1, keepdims=True)), eps)
    a_n = (a / an).astype(jnp.bfloat16)
    b_n = (b / bn).astype(jnp.bfloat16)
    # contract the feature dims directly (no .T relayout feeding the MXU)
    o_ref[...] = lax.dot_general(a_n, b_n, (((1,), (1,)), ((), ())),
                                 preferred_element_type=jnp.float32)


def matrix_cosine(a, b):
    m, d = a.shape
    n = b.shape[0]
    return pl.pallas_call(
        _matrix_cosine_kernel,
        grid=(1,),
        in_specs=[pl.BlockSpec((m, d), lambda i: (0, 0)),
                  pl.BlockSpec((n, d), lambda i: (0, 0))],
        out_specs=pl.BlockSpec((m, n), lambda i: (0, 0)),
        out_shape=jax.ShapeDtypeStruct((m, n), jnp.float32),
        compiler_params=pltpu.CompilerParams(dimension_semantics=("arbitrary",)),
    )(a, b)


# --------------------------------------------------------------------------------------
# The model
# --------------------------------------------------------------------------------------
class MotiFiestaPallas:
    """Pallas re-implementation of MotiFiesta.forward (loss_fn='mot' path)."""

    def __init__(self, n_features=16, dim=32, steps=5, key=None):
        self.steps = steps
        self.n_features = n_features
        self.hidden_dim = dim
        self.f_pad = max(n_features, dim)
        key = jax.random.PRNGKey(0) if key is None else key

        w_emb, b_emb, w_sc1, w_sc2, b_sc = [], [], [], [], []
        f_in = n_features
        for _ in range(steps + 1):          # build_layers: 1 + steps EdgePooling layers
            key, k1, k2 = jax.random.split(key, 3)
            w = jax.random.normal(k1, (f_in, dim), jnp.float32) / jnp.sqrt(jnp.float32(f_in))
            w_emb.append(jnp.pad(w, ((0, self.f_pad - f_in), (0, 0))))   # zero-pad rows
            b_emb.append(jnp.zeros((1, dim), jnp.float32))
            wsc = jax.random.normal(k2, (2 * dim,), jnp.float32) / jnp.sqrt(
                jnp.float32(2 * dim))
            w_sc1.append(wsc[:dim].reshape(1, dim))
            w_sc2.append(wsc[dim:].reshape(1, dim))
            b_sc.append(0.0)
            f_in = dim
        self.w_emb = jnp.stack(w_emb)                 # (steps+1, Fp, D)
        self.b_emb = jnp.stack(b_emb)                 # (steps+1, 1, D)
        self.w_sc1 = jnp.stack(w_sc1)                 # (steps+1, 1, D)
        self.w_sc2 = jnp.stack(w_sc2)                 # (steps+1, 1, D)
        self.b_sc = jnp.asarray(b_sc, jnp.float32)    # (steps+1,) scalar biases -> SMEM

    def _level_plan(self, n_nodes, n_edges):
        """Static per-level (node_count, pair_count) plan; mirrors the reference break
        condition (stop when fewer than 1 edge / 2 nodes remain)."""
        plan, n, e = [], n_nodes, n_edges
        for _ in range(self.steps + 1):
            if n < 2 or e < 1 or n % 2 != 0:
                # TODO(synk): odd node counts would need an unmatched left-over node as in
                # the reference greedy matching; the static plan stops instead.
                break
            p = n // 2
            plan.append((n, p))
            n, e = p, p - 1                  # coarsened chain graph
        return plan

    def forward(self, x_pos, e_pos, b_pos, x_neg=None, e_neg=None, b_neg=None,
                loss_fn='mot', beta=1.0, lam=1.0, k=30):
        if loss_fn == 'rec':
            # TODO(synk): rec_loss_fn needs build_wwl_K / get_edge_subgraphs (WWL graph
            # kernel on host CPU); only matrix_cosine (K_predict) is a Pallas kernel.
            raise NotImplementedError("rec loss requires host-side WWL graph kernel")
        assert x_neg is not None and x_neg.shape == x_pos.shape, \
            "mot loss assumes matching pos/neg node-feature shapes"
        # TODO(synk): batch vector / merge_tree / spotlights bookkeeping is host-side
        # python in the reference and does not affect the 'mot' loss value.
        n_nodes, n_feat = x_pos.shape
        plan = self._level_plan(n_nodes, int(e_pos.shape[1]))
        if not plan:
            return jnp.float32(0.0)

        pad = self.f_pad - n_feat
        xp = jnp.pad(x_pos, ((0, 0), (0, pad))) if pad else x_pos
        xn = jnp.pad(x_neg, ((0, 0), (0, pad))) if pad else x_neg
        x_all = jnp.concatenate([xp, xn], axis=0)      # (2N, Fp): pos rows then neg rows

        return motif_forward_fused(x_all, self.w_emb, self.b_emb, self.w_sc1,
                                   self.w_sc2, self.b_sc, plan,
                                   dim=self.hidden_dim, k_nn=k, beta=beta,
                                   lam=lam, steps=self.steps)


if __name__ == "__main__":
    key = jax.random.PRNGKey(0)
    k1, k2, k3 = jax.random.split(key, 3)

    N, F, D, STEPS = 64, 16, 32, 3
    x_pos = jax.random.normal(k1, (N, F), jnp.float32)
    x_neg = jax.random.normal(k2, (N, F), jnp.float32)
    src = jnp.arange(0, N - 1, dtype=jnp.int32)
    edge_index = jnp.stack([src, src + 1])             # (2, N-1) chain graph
    batch = jnp.zeros((N,), jnp.int32)

    model = MotiFiestaPallas(n_features=F, dim=D, steps=STEPS, key=k3)
    loss = model.forward(x_pos, edge_index, batch, x_neg, edge_index, batch,
                         loss_fn='mot')
    loss = jax.block_until_ready(loss)

    # exercise the matrix_cosine kernel (K_predict of the 'rec' loss path) once as well
    _ = jax.block_until_ready(matrix_cosine(x_pos[:20], x_pos[:20]))

    print("KERNEL_OK")
</pallas_src>

<mosaic_0001>
module attributes {stable_mosaic.version = 11 : i64} {
  func.func @kernel(%arg0: i32, %arg1: memref<128x32xf32, #tpu.memory_space<vmem>>, %arg2: memref<4x32x32xf32, #tpu.memory_space<vmem>>, %arg3: memref<4x1x32xf32, #tpu.memory_space<vmem>>, %arg4: memref<4x1x32xf32, #tpu.memory_space<vmem>>, %arg5: memref<4x1x32xf32, #tpu.memory_space<vmem>>, %arg6: memref<4xf32, #tpu.memory_space<smem>>, %arg7: memref<1xf32, #tpu.memory_space<smem>>, %arg8: memref<128x32xf32, #tpu.memory_space<vmem>>, %arg9: memref<128x32xf32, #tpu.memory_space<vmem>>) attributes {dimension_semantics = [#tpu.dimension_semantics<arbitrary>], iteration_bounds = array<i64: 1>, scalar_prefetch = 0 : i64, scratch_operands = 2 : i64, tpu.core_type = #tpu.core_type<tc>, window_params = [{pipeline_mode = #tpu.pipeline_mode<synchronous>, transform_indices = @transform_0, window_bounds = array<i64: 128, 32>}, {pipeline_mode = #tpu.pipeline_mode<synchronous>, transform_indices = @transform_1, window_bounds = array<i64: 4, 32, 32>}, {pipeline_mode = #tpu.pipeline_mode<synchronous>, transform_indices = @transform_2, window_bounds = array<i64: 4, 1, 32>}, {pipeline_mode = #tpu.pipeline_mode<synchronous>, transform_indices = @transform_3, window_bounds = array<i64: 4, 1, 32>}, {pipeline_mode = #tpu.pipeline_mode<synchronous>, transform_indices = @transform_4, window_bounds = array<i64: 4, 1, 32>}, {transform_indices = @transform_5, window_bounds = array<i64: 4>}, {transform_indices = @transform_6, window_bounds = array<i64: 1>}]} {
    %c0 = arith.constant 0 : index
    %c0_0 = arith.constant 0 : index
    %0 = vector.load %arg1[%c0, %c0_0] : memref<128x32xf32, #tpu.memory_space<vmem>>, vector<128x32xf32>
    %c0_1 = arith.constant 0 : index
    %c0_2 = arith.constant 0 : index
    %1 = vector.load %arg8[%c0_1, %c0_2] : memref<128x32xf32, #tpu.memory_space<vmem>>, vector<128x32xf32>
    tpu.vector_store %arg8[%c0_1, %c0_2], %0 {strides = array<i32>} : memref<128x32xf32, #tpu.memory_space<vmem>>, vector<128x32xf32>,
    %cst = arith.constant 1.000000e+00 : bf16
    %2 = vector.broadcast %cst : bf16 to vector<1x32xbf16>
    %c0_3 = arith.constant 0 : index
    %c0_4 = arith.constant 0 : index
    %3 = vector.load %arg8[%c0_3, %c0_4] : memref<128x32xf32, #tpu.memory_space<vmem>>, vector<128x32xf32>
    %c0_5 = arith.constant 0 : index
    %c0_6 = arith.constant 0 : index
    %c0_7 = arith.constant 0 : index
    %4 = vector.load %arg2[%c0_5, %c0_6, %c0_7] : memref<4x32x32xf32, #tpu.memory_space<vmem>>, vector<1x32x32xf32>
    %5 = vector.shape_cast %4 : vector<1x32x32xf32> to vector<32x32xf32>
    %6 = arith.truncf %5 : vector<32x32xf32> to vector<32x32xbf16>
    %7 = arith.truncf %3 : vector<128x32xf32> to vector<128x32xbf16>
    %cst_8 = arith.constant dense<0.000000e+00> : vector<128x32xf32>
    %8 = tpu.matmul %7, %6, %cst_8 {dimension_numbers = #tpu.dot_dimension_numbers<[1], [0], [0], [1], [0, 0, 1, 1], [], []>} : vector<128x32xbf16>, vector<32x32xbf16>, vector<128x32xf32> -> vector<128x32xf32>
    %c0_9 = arith.constant 0 : index
    %c0_10 = arith.constant 0 : index
    %c0_11 = arith.constant 0 : index
    %9 = vector.load %arg3[%c0_9, %c0_10, %c0_11] : memref<4x1x32xf32, #tpu.memory_space<vmem>>, vector<1x1x32xf32>
    %10 = vector.shape_cast %9 : vector<1x1x32xf32> to vector<1x32xf32>
    %11 = vector.broadcast %10 : vector<1x32xf32> to vector<128x32xf32>
    %12 = arith.addf %8, %11 : vector<128x32xf32>
    %cst_12 = arith.constant 0.000000e+00 : f32
    %13 = vector.broadcast %cst_12 : f32 to vector<128x32xf32>
    %14 = arith.maximumf %12, %13 : vector<128x32xf32>
    %c0_13 = arith.constant 0 : index
    %c0_14 = arith.constant 0 : index
    %15 = vector.load %arg9[%c0_13, %c0_14] : memref<128x32xf32, #tpu.memory_space<vmem>>, vector<128x32xf32>
    tpu.vector_store %arg9[%c0_13, %c0_14], %14 {strides = array<i32>} : memref<128x32xf32, #tpu.memory_space<vmem>>, vector<128x32xf32>,
    %c0_15 = arith.constant 0 : index
    %c0_16 = arith.constant 0 : index
    %16 = tpu.strided_load %arg9[%c0_15, %c0_16] {strides = array<i32: 2, 1>} : memref<128x32xf32, #tpu.memory_space<vmem>>, vector<64x32xf32>
    %c1 = arith.constant 1 : index
    %c0_17 = arith.constant 0 : index
    %17 = tpu.strided_load %arg9[%c1, %c0_17] {strides = array<i32: 2, 1>} : memref<128x32xf32, #tpu.memory_space<vmem>>, vector<64x32xf32>
    %c0_18 = arith.constant 0 : index
    %c0_19 = arith.constant 0 : index
    %c0_20 = arith.constant 0 : index
    %18 = vector.load %arg4[%c0_18, %c0_19, %c0_20] : memref<4x1x32xf32, #tpu.memory_space<vmem>>, vector<1x1x32xf32>
    %19 = vector.shape_cast %18 : vector<1x1x32xf32> to vector<1x32xf32>
    %20 = vector.broadcast %19 : vector<1x32xf32> to vector<64x32xf32>
    %21 = arith.mulf %16, %20 : vector<64x32xf32>
    %cst_21 = arith.constant dense<0.000000e+00> : vector<64xf32>
    %22 = vector.multi_reduction <add>, %21, %cst_21 [1] : vector<64x32xf32> to vector<64xf32>
    %23 = vector.shape_cast %22 : vector<64xf32> to vector<64x1xf32>
    %c0_22 = arith.constant 0 : index
    %c0_23 = arith.constant 0 : index
    %c0_24 = arith.constant 0 : index
    %24 = vector.load %arg5[%c0_22, %c0_23, %c0_24] : memref<4x1x32xf32, #tpu.memory_space<vmem>>, vector<1x1x32xf32>
    %25 = vector.shape_cast %24 : vector<1x1x32xf32> to vector<1x32xf32>
    %26 = vector.broadcast %25 : vector<1x32xf32> to vector<64x32xf32>
    %27 = arith.mulf %17, %26 : vector<64x32xf32>
    %cst_25 = arith.constant dense<0.000000e+00> : vector<64xf32>
    %28 = vector.multi_reduction <add>, %27, %cst_25 [1] : vector<64x32xf32> to vector<64xf32>
    %29 = vector.shape_cast %28 : vector<64xf32> to vector<64x1xf32>
    %30 = arith.addf %23, %29 : vector<64x1xf32>
    %c0_26 = arith.constant 0 : index
    %31 = memref.load %arg6[%c0_26] : memref<4xf32, #tpu.memory_space<smem>>
    %32 = vector.broadcast %31 : f32 to vector<64x1xf32>
    %33 = arith.addf %30, %32 : vector<64x1xf32>
    %cst_27 = arith.constant -3.000000e+01 : f32
    %cst_28 = arith.constant 3.000000e+01 : f32
    %34 = vector.broadcast %cst_27 : f32 to vector<64x1xf32>
    %35 = arith.maximumf %34, %33 : vector<64x1xf32>
    %36 = vector.broadcast %cst_28 : f32 to vector<64x1xf32>
    %37 = arith.minimumf %36, %35 : vector<64x1xf32>
    %cst_29 = arith.constant 0.000000e+00 : f32
    %38 = vector.broadcast %cst_29 : f32 to vector<64x1xf32>
    %39 = arith.subf %38, %37 : vector<64x1xf32>
    %40 = math.exp %39 : vector<64x1xf32>
    %cst_30 = arith.constant 1.000000e+00 : f32
    %41 = vector.broadcast %cst_30 : f32 to vector<64x1xf32>
    %42 = arith.addf %41, %40 : vector<64x1xf32>
    %cst_31 = arith.constant 1.000000e+00 : f32
    %43 = vector.broadcast %cst_31 : f32 to vector<64x1xf32>
    %44 = arith.divf %43, %42 : vector<64x1xf32>
    %45 = arith.addf %16, %17 : vector<64x32xf32>
    %46 = vector.broadcast %44 : vector<64x1xf32> to vector<64x32xf32>
    %47 = arith.mulf %45, %46 : vector<64x32xf32>
    %48 = vector.extract_strided_slice %47 {offsets = [0, 0], sizes = [32, 32], strides = [1, 1]} : vector<64x32xf32> to vector<32x32xf32>
    %49 = vector.extract_strided_slice %44 {offsets = [0, 0], sizes = [32, 1], strides = [1, 1]} : vector<64x1xf32> to vector<32x1xf32>
    %50 = arith.mulf %48, %48 : vector<32x32xf32>
    %cst_32 = arith.constant dense<0.000000e+00> : vector<32xf32>
    %51 = vector.multi_reduction <add>, %50, %cst_32 [1] : vector<32x32xf32> to vector<32xf32>
    %52 = vector.shape_cast %51 : vector<32xf32> to vector<32x1xf32>
    %53 = arith.truncf %47 : vector<64x32xf32> to vector<64x32xbf16>
    %54 = vector.extract_strided_slice %53 {offsets = [0, 0], sizes = [32, 32], strides = [1, 1]} : vector<64x32xbf16> to vector<32x32xbf16>
    %cst_33 = arith.constant dense<0.000000e+00> : vector<32x64xf32>
    %55 = tpu.matmul %54, %53, %cst_33 {dimension_numbers = #tpu.dot_dimension_numbers<[1], [1], [0], [0], [0, 0, 1, 0], [], []>} : vector<32x32xbf16>, vector<64x32xbf16>, vector<32x64xf32> -> vector<32x64xf32>
    %56 = arith.mulf %47, %47 : vector<64x32xf32>
    %57 = arith.truncf %56 : vector<64x32xf32> to vector<64x32xbf16>
    %cst_34 = arith.constant dense<0.000000e+00> : vector<1x64xf32>
    %58 = tpu.matmul %2, %57, %cst_34 {dimension_numbers = #tpu.dot_dimension_numbers<[1], [1], [0], [0], [0, 0, 1, 0], [], []>} : vector<1x32xbf16>, vector<64x32xbf16>, vector<1x64xf32> -> vector<1x64xf32>
    %cst_35 = arith.constant 2.000000e+00 : f32
    %59 = vector.broadcast %cst_35 : f32 to vector<32x64xf32>
    %60 = arith.mulf %59, %55 : vector<32x64xf32>
    %61 = vector.broadcast %58 : vector<1x64xf32> to vector<32x64xf32>
    %62 = arith.subf %61, %60 : vector<32x64xf32>
    %63 = tpu.iota {dimensions = array<i32: 1>} : vector<32x64xi32>
    %c32_i32 = arith.constant 32 : i32
    %64 = vector.broadcast %c32_i32 : i32 to vector<32x64xi32>
    %65 = arith.cmpi slt, %63, %64 : vector<32x64xi32>
    %cst_36 = arith.constant 0.000000e+00 : f32
    %cst_37 = arith.constant 1.000000e+30 : f32
    %66 = arith.subf %cst_36, %cst_37 : f32
    %67 = vector.broadcast %66 : f32 to vector<32x64xf32>
    %68 = arith.select %65, %62, %67 : vector<32x64xi1>, vector<32x64xf32>
    %cst_38 = arith.constant dense<0xFF800000> : vector<32xf32>
    %69 = vector.multi_reduction <maximumf>, %68, %cst_38 [1] : vector<32x64xf32> to vector<32xf32>
    %70 = vector.shape_cast %69 : vector<32xf32> to vector<32x1xf32>
    %71 = vector.broadcast %70 : vector<32x1xf32> to vector<32x64xf32>
    %72 = arith.cmpf oeq, %68, %71 : vector<32x64xf32>
    %cst_39 = arith.constant 0.000000e+00 : f32
    %cst_40 = arith.constant 1.000000e+30 : f32
    %73 = arith.subf %cst_39, %cst_40 : f32
    %74 = vector.broadcast %73 : f32 to vector<32x64xf32>
    %75 = arith.select %72, %74, %68 : vector<32x64xi1>, vector<32x64xf32>
    %cst_41 = arith.constant dense<0xFF800000> : vector<32xf32>
    %76 = vector.multi_reduction <maximumf>, %75, %cst_41 [1] : vector<32x64xf32> to vector<32xf32>
    %77 = vector.shape_cast %76 : vector<32xf32> to vector<32x1xf32>
    %78 = vector.broadcast %77 : vector<32x1xf32> to vector<32x64xf32>
    %79 = arith.cmpf oeq, %75, %78 : vector<32x64xf32>
    %cst_42 = arith.constant 0.000000e+00 : f32
    %cst_43 = arith.constant 1.000000e+30 : f32
    %80 = arith.subf %cst_42, %cst_43 : f32
    %81 = vector.broadcast %80 : f32 to vector<32x64xf32>
    %82 = arith.select %79, %81, %75 : vector<32x64xi1>, vector<32x64xf32>
    %cst_44 = arith.constant dense<0xFF800000> : vector<32xf32>
    %83 = vector.multi_reduction <maximumf>, %82, %cst_44 [1] : vector<32x64xf32> to vector<32xf32>
    %84 = vector.shape_cast %83 : vector<32xf32> to vector<32x1xf32>
    %85 = arith.addf %84, %52 : vector<32x1xf32>
    %cst_45 = arith.constant 0.000000e+00 : f32
    %86 = vector.broadcast %cst_45 : f32 to vector<32x1xf32>
    %87 = arith.maximumf %85, %86 : vector<32x1xf32>
    %88 = math.sqrt %87 : vector<32x1xf32>
    %c32_i32_46 = arith.constant 32 : i32
    %89 = vector.broadcast %c32_i32_46 : i32 to vector<32x64xi32>
    %90 = arith.cmpi sge, %63, %89 : vector<32x64xi32>
    %cst_47 = arith.constant 0.000000e+00 : f32
    %cst_48 = arith.constant 1.000000e+30 : f32
    %91 = arith.subf %cst_47, %cst_48 : f32
    %92 = vector.broadcast %91 : f32 to vector<32x64xf32>
    %93 = arith.select %90, %62, %92 : vector<32x64xi1>, vector<32x64xf32>
    %cst_49 = arith.constant dense<0xFF800000> : vector<32xf32>
    %94 = vector.multi_reduction <maximumf>, %93, %cst_49 [1] : vector<32x64xf32> to vector<32xf32>
    %95 = vector.shape_cast %94 : vector<32xf32> to vector<32x1xf32>
    %96 = vector.broadcast %95 : vector<32x1xf32> to vector<32x64xf32>
    %97 = arith.cmpf oeq, %93, %96 : vector<32x64xf32>
    %cst_50 = arith.constant 0.000000e+00 : f32
    %cst_51 = arith.constant 1.000000e+30 : f32
    %98 = arith.subf %cst_50, %cst_51 : f32
    %99 = vector.broadcast %98 : f32 to vector<32x64xf32>
    %100 = arith.select %97, %99, %93 : vector<32x64xi1>, vector<32x64xf32>
    %cst_52 = arith.constant dense<0xFF800000> : vector<32xf32>
    %101 = vector.multi_reduction <maximumf>, %100, %cst_52 [1] : vector<32x64xf32> to vector<32xf32>
    %102 = vector.shape_cast %101 : vector<32xf32> to vector<32x1xf32>
    %103 = vector.broadcast %102 : vector<32x1xf32> to vector<32x64xf32>
    %104 = arith.cmpf oeq, %100, %103 : vector<32x64xf32>
    %cst_53 = arith.constant 0.000000e+00 : f32
    %cst_54 = arith.constant 1.000000e+30 : f32
    %105 = arith.subf %cst_53, %cst_54 : f32
    %106 = vector.broadcast %105 : f32 to vector<32x64xf32>
    %107 = arith.select %104, %106, %100 : vector<32x64xi1>, vector<32x64xf32>
    %cst_55 = arith.constant dense<0xFF800000> : vector<32xf32>
    %108 = vector.multi_reduction <maximumf>, %107, %cst_55 [1] : vector<32x64xf32> to vector<32xf32>
    %109 = vector.shape_cast %108 : vector<32xf32> to vector<32x1xf32>
    %110 = arith.addf %109, %52 : vector<32x1xf32>
    %cst_56 = arith.constant 0.000000e+00 : f32
    %111 = vector.broadcast %cst_56 : f32 to vector<32x1xf32>
    %112 = arith.maximumf %110, %111 : vector<32x1xf32>
    %113 = math.sqrt %112 : vector<32x1xf32>
    %cst_57 = arith.constant 0.000000e+00 : f32
    %cst_58 = arith.constant 1.000000e+00 : f32
    %114 = arith.subf %cst_57, %cst_58 : f32
    %115 = arith.subf %88, %113 : vector<32x1xf32>
    %116 = vector.broadcast %114 : f32 to vector<32x1xf32>
    %117 = arith.mulf %116, %115 : vector<32x1xf32>
    %cst_59 = arith.constant 6.000000e+01 : f32
    %118 = vector.broadcast %cst_59 : f32 to vector<32x1xf32>
    %119 = arith.minimumf %117, %118 : vector<32x1xf32>
    %cst_60 = arith.constant 0.000000e+00 : f32
    %120 = vector.broadcast %cst_60 : f32 to vector<32x1xf32>
    %121 = arith.subf %120, %49 : vector<32x1xf32>
    %122 = math.exp %119 : vector<32x1xf32>
    %123 = arith.mulf %121, %122 : vector<32x1xf32>
    %124 = vector.shape_cast %123 : vector<32x1xf32> to vector<1x32x1xf32>
    %cst_61 = arith.constant dense<0.000000e+00> : vector<1xf32>
    %125 = vector.multi_reduction <add>, %124, %cst_61 [1, 2] : vector<1x32x1xf32> to vector<1xf32>
    %126 = vector.shape_cast %125 : vector<1xf32> to vector<1x1x1xf32>
    %127 = vector.extract %126[0, 0, 0] : f32 from vector<1x1x1xf32>
    %cst_62 = arith.constant 3.200000e+01 : f32
    %128 = arith.divf %127, %cst_62 : f32
    %129 = arith.mulf %49, %49 : vector<32x1xf32>
    %130 = vector.shape_cast %129 : vector<32x1xf32> to vector<1x32x1xf32>
    %cst_63 = arith.constant dense<0.000000e+00> : vector<1xf32>
    %131 = vector.multi_reduction <add>, %130, %cst_63 [1, 2] : vector<1x32x1xf32> to vector<1xf32>
    %132 = vector.shape_cast %131 : vector<1xf32> to vector<1x1x1xf32>
    %133 = vector.extract %132[0, 0, 0] : f32 from vector<1x1x1xf32>
    %cst_64 = arith.constant 3.200000e+01 : f32
    %134 = arith.divf %133, %cst_64 : f32
    %cst_65 = arith.constant 1.000000e+00 : f32
    %135 = arith.mulf %cst_65, %134 : f32
    %136 = arith.addf %128, %135 : f32
    %cst_66 = arith.constant 0.000000e+00 : f32
    %137 = arith.addf %cst_66, %136 : f32
    %c0_67 = arith.constant 0 : index
    %c0_68 = arith.constant 0 : index
    %138 = vector.load %arg8[%c0_67, %c0_68] : memref<128x32xf32, #tpu.memory_space<vmem>>, vector<64x32xf32>
    tpu.vector_store %arg8[%c0_67, %c0_68], %47 {strides = array<i32>} : memref<128x32xf32, #tpu.memory_space<vmem>>, vector<64x32xf32>,
    %c0_69 = arith.constant 0 : index
    %c0_70 = arith.constant 0 : index
    %139 = vector.load %arg8[%c0_69, %c0_70] : memref<128x32xf32, #tpu.memory_space<vmem>>, vector<64x32xf32>
    %c1_71 = arith.constant 1 : index
    %c0_72 = arith.constant 0 : index
    %c0_73 = arith.constant 0 : index
    %140 = vector.load %arg2[%c1_71, %c0_72, %c0_73] : memref<4x32x32xf32, #tpu.memory_space<vmem>>, vector<1x32x32xf32>
    %141 = vector.shape_cast %140 : vector<1x32x32xf32> to vector<32x32xf32>
    %142 = arith.truncf %141 : vector<32x32xf32> to vector<32x32xbf16>
    %143 = arith.truncf %139 : vector<64x32xf32> to vector<64x32xbf16>
    %cst_74 = arith.constant dense<0.000000e+00> : vector<64x32xf32>
    %144 = tpu.matmul %143, %142, %cst_74 {dimension_numbers = #tpu.dot_dimension_numbers<[1], [0], [0], [1], [0, 0, 1, 1], [], []>} : vector<64x32xbf16>, vector<32x32xbf16>, vector<64x32xf32> -> vector<64x32xf32>
    %c1_75 = arith.constant 1 : index
    %c0_76 = arith.constant 0 : index
    %c0_77 = arith.constant 0 : index
    %145 = vector.load %arg3[%c1_75, %c0_76, %c0_77] : memref<4x1x32xf32, #tpu.memory_space<vmem>>, vector<1x1x32xf32>
    %146 = vector.shape_cast %145 : vector<1x1x32xf32> to vector<1x32xf32>
    %147 = vector.broadcast %146 : vector<1x32xf32> to vector<64x32xf32>
    %148 = arith.addf %144, %147 : vector<64x32xf32>
    %cst_78 = arith.constant 0.000000e+00 : f32
    %149 = vector.broadcast %cst_78 : f32 to vector<64x32xf32>
    %150 = arith.maximumf %148, %149 : vector<64x32xf32>
    %c0_79 = arith.constant 0 : index
    %c0_80 = arith.constant 0 : index
    %151 = vector.load %arg9[%c0_79, %c0_80] : memref<128x32xf32, #tpu.memory_space<vmem>>, vector<64x32xf32>
    tpu.vector_store %arg9[%c0_79, %c0_80], %150 {strides = array<i32>} : memref<128x32xf32, #tpu.memory_space<vmem>>, vector<64x32xf32>,
    %c0_81 = arith.constant 0 : index
    %c0_82 = arith.constant 0 : index
    %152 = tpu.strided_load %arg9[%c0_81, %c0_82] {strides = array<i32: 2, 1>} : memref<128x32xf32, #tpu.memory_space<vmem>>, vector<32x32xf32>
    %c1_83 = arith.constant 1 : index
    %c0_84 = arith.constant 0 : index
    %153 = tpu.strided_load %arg9[%c1_83, %c0_84] {strides = array<i32: 2, 1>} : memref<128x32xf32, #tpu.memory_space<vmem>>, vector<32x32xf32>
    %c1_85 = arith.constant 1 : index
    %c0_86 = arith.constant 0 : index
    %c0_87 = arith.constant 0 : index
    %154 = vector.load %arg4[%c1_85, %c0_86, %c0_87] : memref<4x1x32xf32, #tpu.memory_space<vmem>>, vector<1x1x32xf32>
    %155 = vector.shape_cast %154 : vector<1x1x32xf32> to vector<1x32xf32>
    %156 = vector.broadcast %155 : vector<1x32xf32> to vector<32x32xf32>
    %157 = arith.mulf %152, %156 : vector<32x32xf32>
    %cst_88 = arith.constant dense<0.000000e+00> : vector<32xf32>
    %158 = vector.multi_reduction <add>, %157, %cst_88 [1] : vector<32x32xf32> to vector<32xf32>
    %159 = vector.shape_cast %158 : vector<32xf32> to vector<32x1xf32>
    %c1_89 = arith.constant 1 : index
    %c0_90 = arith.constant 0 : index
    %c0_91 = arith.constant 0 : index
    %160 = vector.load %arg5[%c1_89, %c0_90, %c0_91] : memref<4x1x32xf32, #tpu.memory_space<vmem>>, vector<1x1x32xf32>
    %161 = vector.shape_cast %160 : vector<1x1x32xf32> to vector<1x32xf32>
    %162 = vector.broadcast %161 : vector<1x32xf32> to vector<32x32xf32>
    %163 = arith.mulf %153, %162 : vector<32x32xf32>
    %cst_92 = arith.constant dense<0.000000e+00> : vector<32xf32>
    %164 = vector.multi_reduction <add>, %163, %cst_92 [1] : vector<32x32xf32> to vector<32xf32>
    %165 = vector.shape_cast %164 : vector<32xf32> to vector<32x1xf32>
    %166 = arith.addf %159, %165 : vector<32x1xf32>
    %c1_93 = arith.constant 1 : index
    %167 = memref.load %arg6[%c1_93] : memref<4xf32, #tpu.memory_space<smem>>
    %168 = vector.broadcast %167 : f32 to vector<32x1xf32>
    %169 = arith.addf %166, %168 : vector<32x1xf32>
    %cst_94 = arith.constant -3.000000e+01 : f32
    %cst_95 = arith.constant 3.000000e+01 : f32
    %170 = vector.broadcast %cst_94 : f32 to vector<32x1xf32>
    %171 = arith.maximumf %170, %169 : vector<32x1xf32>
    %172 = vector.broadcast %cst_95 : f32 to vector<32x1xf32>
    %173 = arith.minimumf %172, %171 : vector<32x1xf32>
    %cst_96 = arith.constant 0.000000e+00 : f32
    %174 = vector.broadcast %cst_96 : f32 to vector<32x1xf32>
    %175 = arith.subf %174, %173 : vector<32x1xf32>
    %176 = math.exp %175 : vector<32x1xf32>
    %cst_97 = arith.constant 1.000000e+00 : f32
    %177 = vector.broadcast %cst_97 : f32 to vector<32x1xf32>
    %178 = arith.addf %177, %176 : vector<32x1xf32>
    %cst_98 = arith.constant 1.000000e+00 : f32
    %179 = vector.broadcast %cst_98 : f32 to vector<32x1xf32>
    %180 = arith.divf %179, %178 : vector<32x1xf32>
    %181 = arith.addf %152, %153 : vector<32x32xf32>
    %182 = vector.broadcast %180 : vector<32x1xf32> to vector<32x32xf32>
    %183 = arith.mulf %181, %182 : vector<32x32xf32>
    %184 = vector.extract_strided_slice %183 {offsets = [0, 0], sizes = [16, 32], strides = [1, 1]} : vector<32x32xf32> to vector<16x32xf32>
    %185 = vector.extract_strided_slice %180 {offsets = [0, 0], sizes = [16, 1], strides = [1, 1]} : vector<32x1xf32> to vector<16x1xf32>
    %186 = arith.mulf %184, %184 : vector<16x32xf32>
    %cst_99 = arith.constant dense<0.000000e+00> : vector<16xf32>
    %187 = vector.multi_reduction <add>, %186, %cst_99 [1] : vector<16x32xf32> to vector<16xf32>
    %188 = vector.shape_cast %187 : vector<16xf32> to vector<16x1xf32>
    %189 = arith.truncf %183 : vector<32x32xf32> to vector<32x32xbf16>
    %190 = vector.extract_strided_slice %189 {offsets = [0, 0], sizes = [16, 32], strides = [1, 1]} : vector<32x32xbf16> to vector<16x32xbf16>
    %cst_100 = arith.constant dense<0.000000e+00> : vector<16x32xf32>
    %191 = tpu.matmul %190, %189, %cst_100 {dimension_numbers = #tpu.dot_dimension_numbers<[1], [1], [0], [0], [0, 0, 1, 0], [], []>} : vector<16x32xbf16>, vector<32x32xbf16>, vector<16x32xf32> -> vector<16x32xf32>
    %192 = arith.mulf %183, %183 : vector<32x32xf32>
    %193 = arith.truncf %192 : vector<32x32xf32> to vector<32x32xbf16>
    %cst_101 = arith.constant dense<0.000000e+00> : vector<1x32xf32>
    %194 = tpu.matmul %2, %193, %cst_101 {dimension_numbers = #tpu.dot_dimension_numbers<[1], [1], [0], [0], [0, 0, 1, 0], [], []>} : vector<1x32xbf16>, vector<32x32xbf16>, vector<1x32xf32> -> vector<1x32xf32>
    %cst_102 = arith.constant 2.000000e+00 : f32
    %195 = vector.broadcast %cst_102 : f32 to vector<16x32xf32>
    %196 = arith.mulf %195, %191 : vector<16x32xf32>
    %197 = vector.broadcast %194 : vector<1x32xf32> to vector<16x32xf32>
    %198 = arith.subf %197, %196 : vector<16x32xf32>
    %199 = tpu.iota {dimensions = array<i32: 1>} : vector<16x32xi32>
    %c16_i32 = arith.constant 16 : i32
    %200 = vector.broadcast %c16_i32 : i32 to vector<16x32xi32>
    %201 = arith.cmpi slt, %199, %200 : vector<16x32xi32>
    %cst_103 = arith.constant 0.000000e+00 : f32
    %cst_104 = arith.constant 1.000000e+30 : f32
    %202 = arith.subf %cst_103, %cst_104 : f32
    %203 = vector.broadcast %202 : f32 to vector<16x32xf32>
    %204 = arith.select %201, %198, %203 : vector<16x32xi1>, vector<16x32xf32>
    %cst_105 = arith.constant dense<0xFF800000> : vector<16xf32>
    %205 = vector.multi_reduction <maximumf>, %204, %cst_105 [1] : vector<16x32xf32> to vector<16xf32>
    %206 = vector.shape_cast %205 : vector<16xf32> to vector<16x1xf32>
    %207 = arith.addf %206, %188 : vector<16x1xf32>
    %cst_106 = arith.constant 0.000000e+00 : f32
    %208 = vector.broadcast %cst_106 : f32 to vector<16x1xf32>
    %209 = arith.maximumf %207, %208 : vector<16x1xf32>
    %210 = math.sqrt %209 : vector<16x1xf32>
    %c16_i32_107 = arith.constant 16 : i32
    %211 = vector.broadcast %c16_i32_107 : i32 to vector<16x32xi32>
    %212 = arith.cmpi sge, %199, %211 : vector<16x32xi32>
    %cst_108 = arith.constant 0.000000e+00 : f32
    %cst_109 = arith.constant 1.000000e+30 : f32
    %213 = arith.subf %cst_108, %cst_109 : f32
    %214 = vector.broadcast %213 : f32 to vector<16x32xf32>
    %215 = arith.select %212, %198, %214 : vector<16x32xi1>, vector<16x32xf32>
    %cst_110 = arith.constant dense<0xFF800000> : vector<16xf32>
    %216 = vector.multi_reduction <maximumf>, %215, %cst_110 [1] : vector<16x32xf32> to vector<16xf32>
    %217 = vector.shape_cast %216 : vector<16xf32> to vector<16x1xf32>
    %218 = arith.addf %217, %188 : vector<16x1xf32>
    %cst_111 = arith.constant 0.000000e+00 : f32
    %219 = vector.broadcast %cst_111 : f32 to vector<16x1xf32>
    %220 = arith.maximumf %218, %219 : vector<16x1xf32>
    %221 = math.sqrt %220 : vector<16x1xf32>
    %cst_112 = arith.constant 0.000000e+00 : f32
    %cst_113 = arith.constant 1.000000e+00 : f32
    %222 = arith.subf %cst_112, %cst_113 : f32
    %223 = arith.subf %210, %221 : vector<16x1xf32>
    %224 = vector.broadcast %222 : f32 to vector<16x1xf32>
    %225 = arith.mulf %224, %223 : vector<16x1xf32>
    %cst_114 = arith.constant 6.000000e+01 : f32
    %226 = vector.broadcast %cst_114 : f32 to vector<16x1xf32>
    %227 = arith.minimumf %225, %226 : vector<16x1xf32>
    %cst_115 = arith.constant 0.000000e+00 : f32
    %228 = vector.broadcast %cst_115 : f32 to vector<16x1xf32>
    %229 = arith.subf %228, %185 : vector<16x1xf32>
    %230 = math.exp %227 : vector<16x1xf32>
    %231 = arith.mulf %229, %230 : vector<16x1xf32>
    %232 = vector.shape_cast %231 : vector<16x1xf32> to vector<1x16x1xf32>
    %cst_116 = arith.constant dense<0.000000e+00> : vector<1xf32>
    %233 = vector.multi_reduction <add>, %232, %cst_116 [1, 2] : vector<1x16x1xf32> to vector<1xf32>
    %234 = vector.shape_cast %233 : vector<1xf32> to vector<1x1x1xf32>
    %235 = vector.extract %234[0, 0, 0] : f32 from vector<1x1x1xf32>
    %cst_117 = arith.constant 1.600000e+01 : f32
    %236 = arith.divf %235, %cst_117 : f32
    %237 = arith.mulf %185, %185 : vector<16x1xf32>
    %238 = vector.shape_cast %237 : vector<16x1xf32> to vector<1x16x1xf32>
    %cst_118 = arith.constant dense<0.000000e+00> : vector<1xf32>
    %239 = vector.multi_reduction <add>, %238, %cst_118 [1, 2] : vector<1x16x1xf32> to vector<1xf32>
    %240 = vector.shape_cast %239 : vector<1xf32> to vector<1x1x1xf32>
    %241 = vector.extract %240[0, 0, 0] : f32 from vector<1x1x1xf32>
    %cst_119 = arith.constant 1.600000e+01 : f32
    %242 = arith.divf %241, %cst_119 : f32
    %cst_120 = arith.constant 1.000000e+00 : f32
    %243 = arith.mulf %cst_120, %242 : f32
    %244 = arith.addf %236, %243 : f32
    %245 = arith.addf %137, %244 : f32
    %c0_121 = arith.constant 0 : index
    %c0_122 = arith.constant 0 : index
    %246 = vector.load %arg8[%c0_121, %c0_122] : memref<128x32xf32, #tpu.memory_space<vmem>>, vector<32x32xf32>
    tpu.vector_store %arg8[%c0_121, %c0_122], %183 {strides = array<i32>} : memref<128x32xf32, #tpu.memory_space<vmem>>, vector<32x32xf32>,
    %c0_123 = arith.constant 0 : index
    %c0_124 = arith.constant 0 : index
    %247 = vector.load %arg8[%c0_123, %c0_124] : memref<128x32xf32, #tpu.memory_space<vmem>>, vector<32x32xf32>
    %c2 = arith.constant 2 : index
    %c0_125 = arith.constant 0 : index
    %c0_126 = arith.constant 0 : index
    %248 = vector.load %arg2[%c2, %c0_125, %c0_126] : memref<4x32x32xf32, #tpu.memory_space<vmem>>, vector<1x32x32xf32>
    %249 = vector.shape_cast %248 : vector<1x32x32xf32> to vector<32x32xf32>
    %250 = arith.truncf %249 : vector<32x32xf32> to vector<32x32xbf16>
    %251 = arith.truncf %247 : vector<32x32xf32> to vector<32x32xbf16>
    %cst_127 = arith.constant dense<0.000000e+00> : vector<32x32xf32>
    %252 = tpu.matmul %251, %250, %cst_127 {dimension_numbers = #tpu.dot_dimension_numbers<[1], [0], [0], [1], [0, 0, 1, 1], [], []>} : vector<32x32xbf16>, vector<32x32xbf16>, vector<32x32xf32> -> vector<32x32xf32>
    %c2_128 = arith.constant 2 : index
    %c0_129 = arith.constant 0 : index
    %c0_130 = arith.constant 0 : index
    %253 = vector.load %arg3[%c2_128, %c0_129, %c0_130] : memref<4x1x32xf32, #tpu.memory_space<vmem>>, vector<1x1x32xf32>
    %254 = vector.shape_cast %253 : vector<1x1x32xf32> to vector<1x32xf32>
    %255 = vector.broadcast %254 : vector<1x32xf32> to vector<32x32xf32>
    %256 = arith.addf %252, %255 : vector<32x32xf32>
    %cst_131 = arith.constant 0.000000e+00 : f32
    %257 = vector.broadcast %cst_131 : f32 to vector<32x32xf32>
    %258 = arith.maximumf %256, %257 : vector<32x32xf32>
    %c0_132 = arith.constant 0 : index
    %c0_133 = arith.constant 0 : index
    %259 = vector.load %arg9[%c0_132, %c0_133] : memref<128x32xf32, #tpu.memory_space<vmem>>, vector<32x32xf32>
    tpu.vector_store %arg9[%c0_132, %c0_133], %258 {strides = array<i32>} : memref<128x32xf32, #tpu.memory_space<vmem>>, vector<32x32xf32>,
    %c0_134 = arith.constant 0 : index
    %c0_135 = arith.constant 0 : index
    %260 = tpu.strided_load %arg9[%c0_134, %c0_135] {strides = array<i32: 2, 1>} : memref<128x32xf32, #tpu.memory_space<vmem>>, vector<16x32xf32>
    %c1_136 = arith.constant 1 : index
    %c0_137 = arith.constant 0 : index
    %261 = tpu.strided_load %arg9[%c1_136, %c0_137] {strides = array<i32: 2, 1>} : memref<128x32xf32, #tpu.memory_space<vmem>>, vector<16x32xf32>
    %c2_138 = arith.constant 2 : index
    %c0_139 = arith.constant 0 : index
    %c0_140 = arith.constant 0 : index
    %262 = vector.load %arg4[%c2_138, %c0_139, %c0_140] : memref<4x1x32xf32, #tpu.memory_space<vmem>>, vector<1x1x32xf32>
    %263 = vector.shape_cast %262 : vector<1x1x32xf32> to vector<1x32xf32>
    %264 = vector.broadcast %263 : vector<1x32xf32> to vector<16x32xf32>
    %265 = arith.mulf %260, %264 : vector<16x32xf32>
    %cst_141 = arith.constant dense<0.000000e+00> : vector<16xf32>
    %266 = vector.multi_reduction <add>, %265, %cst_141 [1] : vector<16x32xf32> to vector<16xf32>
    %267 = vector.shape_cast %266 : vector<16xf32> to vector<16x1xf32>
    %c2_142 = arith.constant 2 : index
    %c0_143 = arith.constant 0 : index
    %c0_144 = arith.constant 0 : index
    %268 = vector.load %arg5[%c2_142, %c0_143, %c0_144] : memref<4x1x32xf32, #tpu.memory_space<vmem>>, vector<1x1x32xf32>
    %269 = vector.shape_cast %268 : vector<1x1x32xf32> to vector<1x32xf32>
    %270 = vector.broadcast %269 : vector<1x32xf32> to vector<16x32xf32>
    %271 = arith.mulf %261, %270 : vector<16x32xf32>
    %cst_145 = arith.constant dense<0.000000e+00> : vector<16xf32>
    %272 = vector.multi_reduction <add>, %271, %cst_145 [1] : vector<16x32xf32> to vector<16xf32>
    %273 = vector.shape_cast %272 : vector<16xf32> to vector<16x1xf32>
    %274 = arith.addf %267, %273 : vector<16x1xf32>
    %c2_146 = arith.constant 2 : index
    %275 = memref.load %arg6[%c2_146] : memref<4xf32, #tpu.memory_space<smem>>
    %276 = vector.broadcast %275 : f32 to vector<16x1xf32>
    %277 = arith.addf %274, %276 : vector<16x1xf32>
    %cst_147 = arith.constant -3.000000e+01 : f32
    %cst_148 = arith.constant 3.000000e+01 : f32
    %278 = vector.broadcast %cst_147 : f32 to vector<16x1xf32>
    %279 = arith.maximumf %278, %277 : vector<16x1xf32>
    %280 = vector.broadcast %cst_148 : f32 to vector<16x1xf32>
    %281 = arith.minimumf %280, %279 : vector<16x1xf32>
    %cst_149 = arith.constant 0.000000e+00 : f32
    %282 = vector.broadcast %cst_149 : f32 to vector<16x1xf32>
    %283 = arith.subf %282, %281 : vector<16x1xf32>
    %284 = math.exp %283 : vector<16x1xf32>
    %cst_150 = arith.constant 1.000000e+00 : f32
    %285 = vector.broadcast %cst_150 : f32 to vector<16x1xf32>
    %286 = arith.addf %285, %284 : vector<16x1xf32>
    %cst_151 = arith.constant 1.000000e+00 : f32
    %287 = vector.broadcast %cst_151 : f32 to vector<16x1xf32>
    %288 = arith.divf %287, %286 : vector<16x1xf32>
    %289 = arith.addf %260, %261 : vector<16x32xf32>
    %290 = vector.broadcast %288 : vector<16x1xf32> to vector<16x32xf32>
    %291 = arith.mulf %289, %290 : vector<16x32xf32>
    %292 = vector.extract_strided_slice %291 {offsets = [0, 0], sizes = [8, 32], strides = [1, 1]} : vector<16x32xf32> to vector<8x32xf32>
    %293 = vector.extract_strided_slice %288 {offsets = [0, 0], sizes = [8, 1], strides = [1, 1]} : vector<16x1xf32> to vector<8x1xf32>
    %294 = arith.mulf %292, %292 : vector<8x32xf32>
    %cst_152 = arith.constant dense<0.000000e+00> : vector<8xf32>
    %295 = vector.multi_reduction <add>, %294, %cst_152 [1] : vector<8x32xf32> to vector<8xf32>
    %296 = vector.shape_cast %295 : vector<8xf32> to vector<8x1xf32>
    %297 = arith.truncf %291 : vector<16x32xf32> to vector<16x32xbf16>
    %298 = vector.extract_strided_slice %297 {offsets = [0, 0], sizes = [8, 32], strides = [1, 1]} : vector<16x32xbf16> to vector<8x32xbf16>
    %cst_153 = arith.constant dense<0.000000e+00> : vector<8x16xf32>
    %299 = tpu.matmul %298, %297, %cst_153 {dimension_numbers = #tpu.dot_dimension_numbers<[1], [1], [0], [0], [0, 0, 1, 0], [], []>} : vector<8x32xbf16>, vector<16x32xbf16>, vector<8x16xf32> -> vector<8x16xf32>
    %300 = arith.mulf %291, %291 : vector<16x32xf32>
    %301 = arith.truncf %300 : vector<16x32xf32> to vector<16x32xbf16>
    %cst_154 = arith.constant dense<0.000000e+00> : vector<1x16xf32>
    %302 = tpu.matmul %2, %301, %cst_154 {dimension_numbers = #tpu.dot_dimension_numbers<[1], [1], [0], [0], [0, 0, 1, 0], [], []>} : vector<1x32xbf16>, vector<16x32xbf16>, vector<1x16xf32> -> vector<1x16xf32>
    %cst_155 = arith.constant 2.000000e+00 : f32
    %303 = vector.broadcast %cst_155 : f32 to vector<8x16xf32>
    %304 = arith.mulf %303, %299 : vector<8x16xf32>
    %305 = vector.broadcast %302 : vector<1x16xf32> to vector<8x16xf32>
    %306 = arith.subf %305, %304 : vector<8x16xf32>
    %307 = tpu.iota {dimensions = array<i32: 1>} : vector<8x16xi32>
    %c8_i32 = arith.constant 8 : i32
    %308 = vector.broadcast %c8_i32 : i32 to vector<8x16xi32>
    %309 = arith.cmpi slt, %307, %308 : vector<8x16xi32>
    %cst_156 = arith.constant 0.000000e+00 : f32
    %cst_157 = arith.constant 1.000000e+30 : f32
    %310 = arith.subf %cst_156, %cst_157 : f32
    %311 = vector.broadcast %310 : f32 to vector<8x16xf32>
    %312 = arith.select %309, %306, %311 : vector<8x16xi1>, vector<8x16xf32>
    %cst_158 = arith.constant dense<0xFF800000> : vector<8xf32>
    %313 = vector.multi_reduction <maximumf>, %312, %cst_158 [1] : vector<8x16xf32> to vector<8xf32>
    %314 = vector.shape_cast %313 : vector<8xf32> to vector<8x1xf32>
    %315 = arith.addf %314, %296 : vector<8x1xf32>
    %cst_159 = arith.constant 0.000000e+00 : f32
    %316 = vector.broadcast %cst_159 : f32 to vector<8x1xf32>
    %317 = arith.maximumf %315, %316 : vector<8x1xf32>
    %318 = math.sqrt %317 : vector<8x1xf32>
    %c8_i32_160 = arith.constant 8 : i32
    %319 = vector.broadcast %c8_i32_160 : i32 to vector<8x16xi32>
    %320 = arith.cmpi sge, %307, %319 : vector<8x16xi32>
    %cst_161 = arith.constant 0.000000e+00 : f32
    %cst_162 = arith.constant 1.000000e+30 : f32
    %321 = arith.subf %cst_161, %cst_162 : f32
    %322 = vector.broadcast %321 : f32 to vector<8x16xf32>
    %323 = arith.select %320, %306, %322 : vector<8x16xi1>, vector<8x16xf32>
    %cst_163 = arith.constant dense<0xFF800000> : vector<8xf32>
    %324 = vector.multi_reduction <maximumf>, %323, %cst_163 [1] : vector<8x16xf32> to vector<8xf32>
    %325 = vector.shape_cast %324 : vector<8xf32> to vector<8x1xf32>
    %326 = arith.addf %325, %296 : vector<8x1xf32>
    %cst_164 = arith.constant 0.000000e+00 : f32
    %327 = vector.broadcast %cst_164 : f32 to vector<8x1xf32>
    %328 = arith.maximumf %326, %327 : vector<8x1xf32>
    %329 = math.sqrt %328 : vector<8x1xf32>
    %cst_165 = arith.constant 0.000000e+00 : f32
    %cst_166 = arith.constant 1.000000e+00 : f32
    %330 = arith.subf %cst_165, %cst_166 : f32
    %331 = arith.subf %318, %329 : vector<8x1xf32>
    %332 = vector.broadcast %330 : f32 to vector<8x1xf32>
    %333 = arith.mulf %332, %331 : vector<8x1xf32>
    %cst_167 = arith.constant 6.000000e+01 : f32
    %334 = vector.broadcast %cst_167 : f32 to vector<8x1xf32>
    %335 = arith.minimumf %333, %334 : vector<8x1xf32>
    %cst_168 = arith.constant 0.000000e+00 : f32
    %336 = vector.broadcast %cst_168 : f32 to vector<8x1xf32>
    %337 = arith.subf %336, %293 : vector<8x1xf32>
    %338 = math.exp %335 : vector<8x1xf32>
    %339 = arith.mulf %337, %338 : vector<8x1xf32>
    %340 = vector.shape_cast %339 : vector<8x1xf32> to vector<1x8x1xf32>
    %cst_169 = arith.constant dense<0.000000e+00> : vector<1xf32>
    %341 = vector.multi_reduction <add>, %340, %cst_169 [1, 2] : vector<1x8x1xf32> to vector<1xf32>
    %342 = vector.shape_cast %341 : vector<1xf32> to vector<1x1x1xf32>
    %343 = vector.extract %342[0, 0, 0] : f32 from vector<1x1x1xf32>
    %cst_170 = arith.constant 8.000000e+00 : f32
    %344 = arith.divf %343, %cst_170 : f32
    %345 = arith.mulf %293, %293 : vector<8x1xf32>
    %346 = vector.shape_cast %345 : vector<8x1xf32> to vector<1x8x1xf32>
    %cst_171 = arith.constant dense<0.000000e+00> : vector<1xf32>
    %347 = vector.multi_reduction <add>, %346, %cst_171 [1, 2] : vector<1x8x1xf32> to vector<1xf32>
    %348 = vector.shape_cast %347 : vector<1xf32> to vector<1x1x1xf32>
    %349 = vector.extract %348[0, 0, 0] : f32 from vector<1x1x1xf32>
    %cst_172 = arith.constant 8.000000e+00 : f32
    %350 = arith.divf %349, %cst_172 : f32
    %cst_173 = arith.constant 1.000000e+00 : f32
    %351 = arith.mulf %cst_173, %350 : f32
    %352 = arith.addf %344, %351 : f32
    %353 = arith.addf %245, %352 : f32
    %c0_174 = arith.constant 0 : index
    %c0_175 = arith.constant 0 : index
    %354 = vector.load %arg8[%c0_174, %c0_175] : memref<128x32xf32, #tpu.memory_space<vmem>>, vector<16x32xf32>
    tpu.vector_store %arg8[%c0_174, %c0_175], %291 {strides = array<i32>} : memref<128x32xf32, #tpu.memory_space<vmem>>, vector<16x32xf32>,
    %c0_176 = arith.constant 0 : index
    %c0_177 = arith.constant 0 : index
    %355 = vector.load %arg8[%c0_176, %c0_177] : memref<128x32xf32, #tpu.memory_space<vmem>>, vector<16x32xf32>
    %c3 = arith.constant 3 : index
    %c0_178 = arith.constant 0 : index
    %c0_179 = arith.constant 0 : index
    %356 = vector.load %arg2[%c3, %c0_178, %c0_179] : memref<4x32x32xf32, #tpu.memory_space<vmem>>, vector<1x32x32xf32>
    %357 = vector.shape_cast %356 : vector<1x32x32xf32> to vector<32x32xf32>
    %358 = arith.truncf %357 : vector<32x32xf32> to vector<32x32xbf16>
    %359 = arith.truncf %355 : vector<16x32xf32> to vector<16x32xbf16>
    %cst_180 = arith.constant dense<0.000000e+00> : vector<16x32xf32>
    %360 = tpu.matmul %359, %358, %cst_180 {dimension_numbers = #tpu.dot_dimension_numbers<[1], [0], [0], [1], [0, 0, 1, 1], [], []>} : vector<16x32xbf16>, vector<32x32xbf16>, vector<16x32xf32> -> vector<16x32xf32>
    %c3_181 = arith.constant 3 : index
    %c0_182 = arith.constant 0 : index
    %c0_183 = arith.constant 0 : index
    %361 = vector.load %arg3[%c3_181, %c0_182, %c0_183] : memref<4x1x32xf32, #tpu.memory_space<vmem>>, vector<1x1x32xf32>
    %362 = vector.shape_cast %361 : vector<1x1x32xf32> to vector<1x32xf32>
    %363 = vector.broadcast %362 : vector<1x32xf32> to vector<16x32xf32>
    %364 = arith.addf %360, %363 : vector<16x32xf32>
    %cst_184 = arith.constant 0.000000e+00 : f32
    %365 = vector.broadcast %cst_184 : f32 to vector<16x32xf32>
    %366 = arith.maximumf %364, %365 : vector<16x32xf32>
    %c0_185 = arith.constant 0 : index
    %c0_186 = arith.constant 0 : index
    %367 = vector.load %arg9[%c0_185, %c0_186] : memref<128x32xf32, #tpu.memory_space<vmem>>, vector<16x32xf32>
    tpu.vector_store %arg9[%c0_185, %c0_186], %366 {strides = array<i32>} : memref<128x32xf32, #tpu.memory_space<vmem>>, vector<16x32xf32>,
    %c0_187 = arith.constant 0 : index
    %c0_188 = arith.constant 0 : index
    %368 = tpu.strided_load %arg9[%c0_187, %c0_188] {strides = array<i32: 2, 1>} : memref<128x32xf32, #tpu.memory_space<vmem>>, vector<8x32xf32>
    %c1_189 = arith.constant 1 : index
    %c0_190 = arith.constant 0 : index
    %369 = tpu.strided_load %arg9[%c1_189, %c0_190] {strides = array<i32: 2, 1>} : memref<128x32xf32, #tpu.memory_space<vmem>>, vector<8x32xf32>
    %c3_191 = arith.constant 3 : index
    %c0_192 = arith.constant 0 : index
    %c0_193 = arith.constant 0 : index
    %370 = vector.load %arg4[%c3_191, %c0_192, %c0_193] : memref<4x1x32xf32, #tpu.memory_space<vmem>>, vector<1x1x32xf32>
    %371 = vector.shape_cast %370 : vector<1x1x32xf32> to vector<1x32xf32>
    %372 = vector.broadcast %371 : vector<1x32xf32> to vector<8x32xf32>
    %373 = arith.mulf %368, %372 : vector<8x32xf32>
    %cst_194 = arith.constant dense<0.000000e+00> : vector<8xf32>
    %374 = vector.multi_reduction <add>, %373, %cst_194 [1] : vector<8x32xf32> to vector<8xf32>
    %375 = vector.shape_cast %374 : vector<8xf32> to vector<8x1xf32>
    %c3_195 = arith.constant 3 : index
    %c0_196 = arith.constant 0 : index
    %c0_197 = arith.constant 0 : index
    %376 = vector.load %arg5[%c3_195, %c0_196, %c0_197] : memref<4x1x32xf32, #tpu.memory_space<vmem>>, vector<1x1x32xf32>
    %377 = vector.shape_cast %376 : vector<1x1x32xf32> to vector<1x32xf32>
    %378 = vector.broadcast %377 : vector<1x32xf32> to vector<8x32xf32>
    %379 = arith.mulf %369, %378 : vector<8x32xf32>
    %cst_198 = arith.constant dense<0.000000e+00> : vector<8xf32>
    %380 = vector.multi_reduction <add>, %379, %cst_198 [1] : vector<8x32xf32> to vector<8xf32>
    %381 = vector.shape_cast %380 : vector<8xf32> to vector<8x1xf32>
    %382 = arith.addf %375, %381 : vector<8x1xf32>
    %c3_199 = arith.constant 3 : index
    %383 = memref.load %arg6[%c3_199] : memref<4xf32, #tpu.memory_space<smem>>
    %384 = vector.broadcast %383 : f32 to vector<8x1xf32>
    %385 = arith.addf %382, %384 : vector<8x1xf32>
    %cst_200 = arith.constant -3.000000e+01 : f32
    %cst_201 = arith.constant 3.000000e+01 : f32
    %386 = vector.broadcast %cst_200 : f32 to vector<8x1xf32>
    %387 = arith.maximumf %386, %385 : vector<8x1xf32>
    %388 = vector.broadcast %cst_201 : f32 to vector<8x1xf32>
    %389 = arith.minimumf %388, %387 : vector<8x1xf32>
    %cst_202 = arith.constant 0.000000e+00 : f32
    %390 = vector.broadcast %cst_202 : f32 to vector<8x1xf32>
    %391 = arith.subf %390, %389 : vector<8x1xf32>
    %392 = math.exp %391 : vector<8x1xf32>
    %cst_203 = arith.constant 1.000000e+00 : f32
    %393 = vector.broadcast %cst_203 : f32 to vector<8x1xf32>
    %394 = arith.addf %393, %392 : vector<8x1xf32>
    %cst_204 = arith.constant 1.000000e+00 : f32
    %395 = vector.broadcast %cst_204 : f32 to vector<8x1xf32>
    %396 = arith.divf %395, %394 : vector<8x1xf32>
    %397 = arith.addf %368, %369 : vector<8x32xf32>
    %398 = vector.broadcast %396 : vector<8x1xf32> to vector<8x32xf32>
    %399 = arith.mulf %397, %398 : vector<8x32xf32>
    %400 = vector.extract_strided_slice %399 {offsets = [0, 0], sizes = [4, 32], strides = [1, 1]} : vector<8x32xf32> to vector<4x32xf32>
    %401 = vector.extract_strided_slice %396 {offsets = [0, 0], sizes = [4, 1], strides = [1, 1]} : vector<8x1xf32> to vector<4x1xf32>
    %402 = arith.mulf %400, %400 : vector<4x32xf32>
    %cst_205 = arith.constant dense<0.000000e+00> : vector<4xf32>
    %403 = vector.multi_reduction <add>, %402, %cst_205 [1] : vector<4x32xf32> to vector<4xf32>
    %404 = vector.shape_cast %403 : vector<4xf32> to vector<4x1xf32>
    %405 = arith.truncf %399 : vector<8x32xf32> to vector<8x32xbf16>
    %406 = vector.extract_strided_slice %405 {offsets = [0, 0], sizes = [4, 32], strides = [1, 1]} : vector<8x32xbf16> to vector<4x32xbf16>
    %cst_206 = arith.constant dense<0.000000e+00> : vector<4x8xf32>
    %407 = tpu.matmul %406, %405, %cst_206 {dimension_numbers = #tpu.dot_dimension_numbers<[1], [1], [0], [0], [0, 0, 1, 0], [], []>} : vector<4x32xbf16>, vector<8x32xbf16>, vector<4x8xf32> -> vector<4x8xf32>
    %408 = arith.mulf %399, %399 : vector<8x32xf32>
    %409 = arith.truncf %408 : vector<8x32xf32> to vector<8x32xbf16>
    %cst_207 = arith.constant dense<0.000000e+00> : vector<1x8xf32>
    %410 = tpu.matmul %2, %409, %cst_207 {dimension_numbers = #tpu.dot_dimension_numbers<[1], [1], [0], [0], [0, 0, 1, 0], [], []>} : vector<1x32xbf16>, vector<8x32xbf16>, vector<1x8xf32> -> vector<1x8xf32>
    %cst_208 = arith.constant 2.000000e+00 : f32
    %411 = vector.broadcast %cst_208 : f32 to vector<4x8xf32>
    %412 = arith.mulf %411, %407 : vector<4x8xf32>
    %413 = vector.broadcast %410 : vector<1x8xf32> to vector<4x8xf32>
    %414 = arith.subf %413, %412 : vector<4x8xf32>
    %415 = tpu.iota {dimensions = array<i32: 1>} : vector<4x8xi32>
    %c4_i32 = arith.constant 4 : i32
    %416 = vector.broadcast %c4_i32 : i32 to vector<4x8xi32>
    %417 = arith.cmpi slt, %415, %416 : vector<4x8xi32>
    %cst_209 = arith.constant 0.000000e+00 : f32
    %cst_210 = arith.constant 1.000000e+30 : f32
    %418 = arith.subf %cst_209, %cst_210 : f32
    %419 = vector.broadcast %418 : f32 to vector<4x8xf32>
    %420 = arith.select %417, %414, %419 : vector<4x8xi1>, vector<4x8xf32>
    %cst_211 = arith.constant dense<0xFF800000> : vector<4xf32>
    %421 = vector.multi_reduction <maximumf>, %420, %cst_211 [1] : vector<4x8xf32> to vector<4xf32>
    %422 = vector.shape_cast %421 : vector<4xf32> to vector<4x1xf32>
    %423 = arith.addf %422, %404 : vector<4x1xf32>
    %cst_212 = arith.constant 0.000000e+00 : f32
    %424 = vector.broadcast %cst_212 : f32 to vector<4x1xf32>
    %425 = arith.maximumf %423, %424 : vector<4x1xf32>
    %426 = math.sqrt %425 : vector<4x1xf32>
    %c4_i32_213 = arith.constant 4 : i32
    %427 = vector.broadcast %c4_i32_213 : i32 to vector<4x8xi32>
    %428 = arith.cmpi sge, %415, %427 : vector<4x8xi32>
    %cst_214 = arith.constant 0.000000e+00 : f32
    %cst_215 = arith.constant 1.000000e+30 : f32
    %429 = arith.subf %cst_214, %cst_215 : f32
    %430 = vector.broadcast %429 : f32 to vector<4x8xf32>
    %431 = arith.select %428, %414, %430 : vector<4x8xi1>, vector<4x8xf32>
    %cst_216 = arith.constant dense<0xFF800000> : vector<4xf32>
    %432 = vector.multi_reduction <maximumf>, %431, %cst_216 [1] : vector<4x8xf32> to vector<4xf32>
    %433 = vector.shape_cast %432 : vector<4xf32> to vector<4x1xf32>
    %434 = arith.addf %433, %404 : vector<4x1xf32>
    %cst_217 = arith.constant 0.000000e+00 : f32
    %435 = vector.broadcast %cst_217 : f32 to vector<4x1xf32>
    %436 = arith.maximumf %434, %435 : vector<4x1xf32>
    %437 = math.sqrt %436 : vector<4x1xf32>
    %cst_218 = arith.constant 0.000000e+00 : f32
    %cst_219 = arith.constant 1.000000e+00 : f32
    %438 = arith.subf %cst_218, %cst_219 : f32
    %439 = arith.subf %426, %437 : vector<4x1xf32>
    %440 = vector.broadcast %438 : f32 to vector<4x1xf32>
    %441 = arith.mulf %440, %439 : vector<4x1xf32>
    %cst_220 = arith.constant 6.000000e+01 : f32
    %442 = vector.broadcast %cst_220 : f32 to vector<4x1xf32>
    %443 = arith.minimumf %441, %442 : vector<4x1xf32>
    %cst_221 = arith.constant 0.000000e+00 : f32
    %444 = vector.broadcast %cst_221 : f32 to vector<4x1xf32>
    %445 = arith.subf %444, %401 : vector<4x1xf32>
    %446 = math.exp %443 : vector<4x1xf32>
    %447 = arith.mulf %445, %446 : vector<4x1xf32>
    %448 = vector.shape_cast %447 : vector<4x1xf32> to vector<1x4x1xf32>
    %cst_222 = arith.constant dense<0.000000e+00> : vector<1xf32>
    %449 = vector.multi_reduction <add>, %448, %cst_222 [1, 2] : vector<1x4x1xf32> to vector<1xf32>
    %450 = vector.shape_cast %449 : vector<1xf32> to vector<1x1x1xf32>
    %451 = vector.extract %450[0, 0, 0] : f32 from vector<1x1x1xf32>
    %cst_223 = arith.constant 4.000000e+00 : f32
    %452 = arith.divf %451, %cst_223 : f32
    %453 = arith.mulf %401, %401 : vector<4x1xf32>
    %454 = vector.shape_cast %453 : vector<4x1xf32> to vector<1x4x1xf32>
    %cst_224 = arith.constant dense<0.000000e+00> : vector<1xf32>
    %455 = vector.multi_reduction <add>, %454, %cst_224 [1, 2] : vector<1x4x1xf32> to vector<1xf32>
    %456 = vector.shape_cast %455 : vector<1xf32> to vector<1x1x1xf32>
    %457 = vector.extract %456[0, 0, 0] : f32 from vector<1x1x1xf32>
    %cst_225 = arith.constant 4.000000e+00 : f32
    %458 = arith.divf %457, %cst_225 : f32
    %cst_226 = arith.constant 1.000000e+00 : f32
    %459 = arith.mulf %cst_226, %458 : f32
    %460 = arith.addf %452, %459 : f32
    %461 = arith.addf %353, %460 : f32
    %cst_227 = arith.constant 3.000000e+00 : f32
    %462 = arith.divf %461, %cst_227 : f32
    %c0_228 = arith.constant 0 : index
    %463 = memref.load %arg7[%c0_228] : memref<1xf32, #tpu.memory_space<smem>>
    memref.store %462, %arg7[%c0_228] : memref<1xf32, #tpu.memory_space<smem>>
    return
  }
  func.func @transform_0(%arg0: i32) -> (i32, i32) {
    %c0_i32 = arith.constant 0 : i32
    %c0_i32_0 = arith.constant 0 : i32
    %c0_i32_1 = arith.constant 0 : i32
    return %c0_i32, %c0_i32_0 : i32, i32
  }
  func.func @transform_1(%arg0: i32) -> (i32, i32, i32) {
    %c0_i32 = arith.constant 0 : i32
    %c0_i32_0 = arith.constant 0 : i32
    %c0_i32_1 = arith.constant 0 : i32
    %c0_i32_2 = arith.constant 0 : i32
    return %c0_i32, %c0_i32_0, %c0_i32_1 : i32, i32, i32
  }
  func.func @transform_2(%arg0: i32) -> (i32, i32, i32) {
    %c0_i32 = arith.constant 0 : i32
    %c0_i32_0 = arith.constant 0 : i32
    %c0_i32_1 = arith.constant 0 : i32
    %c0_i32_2 = arith.constant 0 : i32
    return %c0_i32, %c0_i32_0, %c0_i32_1 : i32, i32, i32
  }
  func.func @transform_3(%arg0: i32) -> (i32, i32, i32) {
    %c0_i32 = arith.constant 0 : i32
    %c0_i32_0 = arith.constant 0 : i32
    %c0_i32_1 = arith.constant 0 : i32
    %c0_i32_2 = arith.constant 0 : i32
    return %c0_i32, %c0_i32_0, %c0_i32_1 : i32, i32, i32
  }
  func.func @transform_4(%arg0: i32) -> (i32, i32, i32) {
    %c0_i32 = arith.constant 0 : i32
    %c0_i32_0 = arith.constant 0 : i32
    %c0_i32_1 = arith.constant 0 : i32
    %c0_i32_2 = arith.constant 0 : i32
    return %c0_i32, %c0_i32_0, %c0_i32_1 : i32, i32, i32
  }
  func.func @transform_5(%arg0: i32) -> i32 {
    %c0_i32 = arith.constant 0 : i32
    %c0_i32_0 = arith.constant 0 : i32
    return %c0_i32 : i32
  }
  func.func @transform_6(%arg0: i32) -> i32 {
    %c0_i32 = arith.constant 0 : i32
    %c0_i32_0 = arith.constant 0 : i32
    return %c0_i32 : i32
  }
}

</mosaic_0001>

<llo_original>
// kernel: tpu_custom_call.1
$region0: #{tpu_custom_call.1}
  #allocation0 [shape = 'u32[]', space=smem, size = 0x4, offset = 0x4, fixed_abs, tag = 'smem constant byte address 0x4 - core index']
  #allocation1 [shape = 'u32[72,128]{1,0:T(1,128)}', space=vmem, size = 0x9000, scoped, tag = 'internal scratch']
  #allocation2 [shape = 'f32[128,32]{1,0:T(8,128)}', space=vmem, size = 0x10000, scoped, tag = 'scratch operand']
  #allocation3 [shape = 'f32[128,32]{1,0:T(8,128)}', space=vmem, size = 0x10000, scoped, tag = 'scratch operand']
  %s0 = inlined_call_operand.vmem [shape: f32[128,32], index: 0, kind: input, shape index: {}]
  %s1 = inlined_call_operand.vmem [shape: f32[4,32,32], index: 1, kind: input, shape index: {}]
  %s2 = inlined_call_operand.vmem [shape: f32[4,1,32], index: 2, kind: input, shape index: {}]
  %s3 = inlined_call_operand.vmem [shape: f32[4,1,32], index: 3, kind: input, shape index: {}]
  %s4 = inlined_call_operand.vmem [shape: f32[4,1,32], index: 4, kind: input, shape index: {}]
  %s5 = inlined_call_operand.vmem [shape: f32[4], index: 5, kind: input, shape index: {}]
  %s6 = inlined_call_operand.hbm [shape: f32[1], index: 6, kind: output, shape index: {}]
  %s7 = sld [smem:[#allocation0]]
  $region38: #{tpu_custom_call.1} parent=0
    _
  %s9 = ssub.s32 1, %s7
  %s10 = scalar_select 0, %s9, %s7
  $region1: #{tpu_custom_call.1} parent=0
    #allocation4 [shape = 'u8[512]{0}', space=smem, size = 0x200, scoped, tag = 'input window, operand 5, single buffered']
    #allocation5 [shape = 's32[1]{0}', space=sflag, size = 0x4, scoped, tag = 'scoped memory for tpu_custom_call.1']
    #allocation6 [shape = 's32[1]{0}', space=sflag, size = 0x4, scoped, tag = 'scoped memory for tpu_custom_call.1']
    #allocation7 [shape = 'u8[512]{0}', space=smem, size = 0x200, scoped, tag = 'output window, operand 0, single buffered']
    %11 = vsyncpa [#allocation6], 0
    %12 = vsyncpa [#allocation5], 0
    // Predicated region
    $region2: #{tpu_custom_call.1} parent=1 // pred_check
      _
    $region3: #{tpu_custom_call.1} parent=1 // pred_check_branch
      %14 = sbr.rel (0) target = $region5
    $region4: #{tpu_custom_call.1} parent=1 // pred_region
      _
    $region5: #{tpu_custom_call.1} parent=1 // pred_fallthru
      _
    // Predicated region
    $region6: #{tpu_custom_call.1} parent=1 // pred_check
      _
    $region7: #{tpu_custom_call.1} parent=1 // pred_check_branch
      %16 = sbr.rel (0) target = $region9
    $region8: #{tpu_custom_call.1} parent=1 // pred_region
      _
    $region9: #{tpu_custom_call.1} parent=1 // pred_fallthru
      _
    // Predicated region
    $region10: #{tpu_custom_call.1} parent=1 // pred_check
      _
    $region11: #{tpu_custom_call.1} parent=1 // pred_check_branch
      %18 = sbr.rel (0) target = $region13
    $region12: #{tpu_custom_call.1} parent=1 // pred_region
      _
    $region13: #{tpu_custom_call.1} parent=1 // pred_fallthru
      _
    // Predicated region
    $region14: #{tpu_custom_call.1} parent=1 // pred_check
      _
    $region15: #{tpu_custom_call.1} parent=1 // pred_check_branch
      %20 = sbr.rel (0) target = $region17
    $region16: #{tpu_custom_call.1} parent=1 // pred_region
      _
    $region17: #{tpu_custom_call.1} parent=1 // pred_fallthru
      _
    // Predicated region
    $region18: #{tpu_custom_call.1} parent=1 // pred_check
      _
    $region19: #{tpu_custom_call.1} parent=1 // pred_check_branch
      %22 = sbr.rel (0) target = $region21
    $region20: #{tpu_custom_call.1} parent=1 // pred_region
      _
    $region21: #{tpu_custom_call.1} parent=1 // pred_fallthru
      _
    // Predicated region
    $region22: #{tpu_custom_call.1} parent=1 // pred_check
      _
    $region23: #{tpu_custom_call.1} parent=1 // pred_check_branch
      %24 = sbr.rel (0) target = $region25
    $region24: #{tpu_custom_call.1} parent=1 // pred_region
      %26 = vsyncadd [#allocation6], 0
      %s28 = sshll.u32 %s5, 4
      %s29 = int_to_ptr.vmem [resolvable:$true] %s28
      %31 = dma.vmem_to_smem %s29, 16, [#allocation4], [#allocation6]
    $region25: #{tpu_custom_call.1} parent=1 // pred_fallthru
      _
    // Predicated region
    $region26: #{tpu_custom_call.1} parent=1 // pred_check
      _
    $region27: #{tpu_custom_call.1} parent=1 // pred_check_branch
      %33 = sbr.rel (0) target = $region29
    $region28: #{tpu_custom_call.1} parent=1 // pred_region
      %35 = dma.done [#allocation6], 16
    $region29: #{tpu_custom_call.1} parent=1 // pred_fallthru
      _
    %36 = sfence
    %v39 = vld [vmem:[%s0] sm:$0xff]
    %v40 = vld [vmem:[%s0 + $0x8] sm:$0xff]
    %v41 = vld [vmem:[%s0 + $0x10] sm:$0xff]
    %v42 = vld [vmem:[%s0 + $0x18] sm:$0xff]
    %v43 = vld [vmem:[%s0 + $0x20] sm:$0xff]
    %v44 = vld [vmem:[%s0 + $0x28] sm:$0xff]
    %v45 = vld [vmem:[%s0 + $0x30] sm:$0xff]
    %v46 = vld [vmem:[%s0 + $0x38] sm:$0xff]
    %v47 = vld [vmem:[%s0 + $0x40] sm:$0xff]
    %v48 = vld [vmem:[%s0 + $0x48] sm:$0xff]
    %v49 = vld [vmem:[%s0 + $0x50] sm:$0xff]
    %v50 = vld [vmem:[%s0 + $0x58] sm:$0xff]
    %v51 = vld [vmem:[%s0 + $0x60] sm:$0xff]
    %v52 = vld [vmem:[%s0 + $0x68] sm:$0xff]
    %v53 = vld [vmem:[%s0 + $0x70] sm:$0xff]
    %v54 = vld [vmem:[%s0 + $0x78] sm:$0xff]
    %vm55 = vcmask 261120
    %56 = vst.msk [vmem:[#allocation2] sm:$0xff] %vm55, %v39
    %57 = vst.msk [vmem:[#allocation2 + $0x8] sm:$0xff] %vm55, %v40
    %58 = vst.msk [vmem:[#allocation2 + $0x10] sm:$0xff] %vm55, %v41
    %59 = vst.msk [vmem:[#allocation2 + $0x18] sm:$0xff] %vm55, %v42
    %60 = vst.msk [vmem:[#allocation2 + $0x20] sm:$0xff] %vm55, %v43
    %61 = vst.msk [vmem:[#allocation2 + $0x28] sm:$0xff] %vm55, %v44
    %62 = vst.msk [vmem:[#allocation2 + $0x30] sm:$0xff] %vm55, %v45
    %63 = vst.msk [vmem:[#allocation2 + $0x38] sm:$0xff] %vm55, %v46
    %64 = vst.msk [vmem:[#allocation2 + $0x40] sm:$0xff] %vm55, %v47
    %65 = vst.msk [vmem:[#allocation2 + $0x48] sm:$0xff] %vm55, %v48
    %66 = vst.msk [vmem:[#allocation2 + $0x50] sm:$0xff] %vm55, %v49
    %67 = vst.msk [vmem:[#allocation2 + $0x58] sm:$0xff] %vm55, %v50
    %68 = vst.msk [vmem:[#allocation2 + $0x60] sm:$0xff] %vm55, %v51
    %69 = vst.msk [vmem:[#allocation2 + $0x68] sm:$0xff] %vm55, %v52
    %70 = vst.msk [vmem:[#allocation2 + $0x70] sm:$0xff] %vm55, %v53
    %71 = vst.msk [vmem:[#allocation2 + $0x78] sm:$0xff] %vm55, %v54
    %v72 = vld [vmem:[#allocation2] sm:$0xff]
    %v73 = vld [vmem:[#allocation2 + $0x8] sm:$0xff]
    %v74 = vld [vmem:[#allocation2 + $0x10] sm:$0xff]
    %v75 = vld [vmem:[#allocation2 + $0x18] sm:$0xff]
    %v76 = vld [vmem:[#allocation2 + $0x20] sm:$0xff]
    %v77 = vld [vmem:[#allocation2 + $0x28] sm:$0xff]
    %v78 = vld [vmem:[#allocation2 + $0x30] sm:$0xff]
    %v79 = vld [vmem:[#allocation2 + $0x38] sm:$0xff]
    %v80 = vld [vmem:[#allocation2 + $0x40] sm:$0xff]
    %v81 = vld [vmem:[#allocation2 + $0x48] sm:$0xff]
    %v82 = vld [vmem:[#allocation2 + $0x50] sm:$0xff]
    %v83 = vld [vmem:[#allocation2 + $0x58] sm:$0xff]
    %v84 = vld [vmem:[#allocation2 + $0x60] sm:$0xff]
    %v85 = vld [vmem:[#allocation2 + $0x68] sm:$0xff]
    %v86 = vld [vmem:[#allocation2 + $0x70] sm:$0xff]
    %v87 = vld [vmem:[#allocation2 + $0x78] sm:$0xff]
    %v88 = vld [vmem:[%s1] sm:$0xff]
    %v89 = vld [vmem:[%s1 + $0x8] sm:$0xff]
    %v90 = vld [vmem:[%s1 + $0x10] sm:$0xff]
    %v91 = vld [vmem:[%s1 + $0x18] sm:$0xff]
    %v92 = vpack.c.bf16 %v89, %v88
    %v93 = vpack.c.bf16 %v91, %v90
    %v94 = vpack.c.bf16 %v73, %v72
    %v95 = vpack.c.bf16 %v75, %v74
    %v96 = vpack.c.bf16 %v77, %v76
    %v97 = vpack.c.bf16 %v79, %v78
    %v98 = vpack.c.bf16 %v81, %v80
    %v99 = vpack.c.bf16 %v83, %v82
    %v100 = vpack.c.bf16 %v85, %v84
    %v101 = vpack.c.bf16 %v87, %v86
    %v102 = vld [vmem:[%s2] sm:$0x1]
    %v104 = vperm.slane %v102, 0
    %v107 = vsel %vm55, %v94, 0
    %v110 = vsel %vm55, %v95, 0
    %v113 = vsel %vm55, %v96, 0
    %v116 = vsel %vm55, %v97, 0
    %v119 = vsel %vm55, %v98, 0
    %v122 = vsel %vm55, %v99, 0
    %v125 = vsel %vm55, %v100, 0
    %v128 = vsel %vm55, %v101, 0
    %130 = vmatpush.bf16.msra.mxu0 0
    %131 = vmatpush.bf16.msra.mxu0 0
    %132 = vmatpush.bf16.msra.mxu0 0
    %133 = vmatpush.bf16.msra.mxu0 0
    %134 = vmatpush.bf16.msra.mxu0 0
    %135 = vmatpush.bf16.msra.mxu0 0
    %136 = vmatpush.bf16.msra.mxu0 %v93
    %137 = vmatpush.bf16.msra.mxu0 %v92
    %138 = vmatmul.bf16.gmra.mxu0 %v107
    %v139 = vpop.f32.mrf.mxu0
    %v140 = vadd.f32 %v104, %v139
    %v141 = vpop.f32.mrf.mxu0
    %v142 = vadd.f32 %v104, %v141
    %143 = vmatmul.bf16.gmra.mxu0 %v110
    %v144 = vpop.f32.mrf.mxu0
    %v145 = vadd.f32 %v104, %v144
    %v146 = vpop.f32.mrf.mxu0
    %v147 = vadd.f32 %v104, %v146
    %148 = vmatmul.bf16.gmra.mxu0 %v113
    %v149 = vpop.f32.mrf.mxu0
    %v150 = vadd.f32 %v104, %v149
    %v151 = vpop.f32.mrf.mxu0
    %v152 = vadd.f32 %v104, %v151
    %153 = vmatmul.bf16.gmra.mxu0 %v116
    %v154 = vpop.f32.mrf.mxu0
    %v155 = vadd.f32 %v104, %v154
    %v156 = vpop.f32.mrf.mxu0
    %v157 = vadd.f32 %v104, %v156
    %158 = vmatmul.bf16.gmra.mxu0 %v119
    %v159 = vpop.f32.mrf.mxu0
    %v160 = vadd.f32 %v104, %v159
    %v161 = vpop.f32.mrf.mxu0
    %v162 = vadd.f32 %v104, %v161
    %163 = vmatmul.bf16.gmra.mxu0 %v122
    %v164 = vpop.f32.mrf.mxu0
    %v165 = vadd.f32 %v104, %v164
    %v166 = vpop.f32.mrf.mxu0
    %v167 = vadd.f32 %v104, %v166
    %168 = vmatmul.bf16.gmra.mxu0 %v125
    %v169 = vpop.f32.mrf.mxu0
    %v170 = vadd.f32 %v104, %v169
    %v171 = vpop.f32.mrf.mxu0
    %v172 = vadd.f32 %v104, %v171
    %173 = vmatmul.bf16.gmra.mxu0 %v128
    %v174 = vpop.f32.mrf.mxu0
    %v175 = vadd.f32 %v104, %v174
    %v176 = vpop.f32.mrf.mxu0
    %v177 = vadd.f32 %v104, %v176
    %178 = vdwg.mxu0
    %v179 = vmax.f32 %v140, 0.0
    %v180 = vmax.f32 %v142, 0.0
    %v181 = vmax.f32 %v145, 0.0
    %v182 = vmax.f32 %v147, 0.0
    %v183 = vmax.f32 %v150, 0.0
    %v184 = vmax.f32 %v152, 0.0
    %v185 = vmax.f32 %v155, 0.0
    %v186 = vmax.f32 %v157, 0.0
    %v187 = vmax.f32 %v160, 0.0
    %v188 = vmax.f32 %v162, 0.0
    %v189 = vmax.f32 %v165, 0.0
    %v190 = vmax.f32 %v167, 0.0
    %v191 = vmax.f32 %v170, 0.0
    %v192 = vmax.f32 %v172, 0.0
    %v193 = vmax.f32 %v175, 0.0
    %v194 = vmax.f32 %v177, 0.0
    %195 = vst.msk [vmem:[#allocation3] sm:$0xff] %vm55, %v179
    %196 = vst.msk [vmem:[#allocation3 + $0x8] sm:$0xff] %vm55, %v180
    %197 = vst.msk [vmem:[#allocation3 + $0x10] sm:$0xff] %vm55, %v181
    %198 = vst.msk [vmem:[#allocation3 + $0x18] sm:$0xff] %vm55, %v182
    %199 = vst.msk [vmem:[#allocation3 + $0x20] sm:$0xff] %vm55, %v183
    %200 = vst.msk [vmem:[#allocation3 + $0x28] sm:$0xff] %vm55, %v184
    %201 = vst.msk [vmem:[#allocation3 + $0x30] sm:$0xff] %vm55, %v185
    %202 = vst.msk [vmem:[#allocation3 + $0x38] sm:$0xff] %vm55, %v186
    %203 = vst.msk [vmem:[#allocation3 + $0x40] sm:$0xff] %vm55, %v187
    %204 = vst.msk [vmem:[#allocation3 + $0x48] sm:$0xff] %vm55, %v188
    %205 = vst.msk [vmem:[#allocation3 + $0x50] sm:$0xff] %vm55, %v189
    %206 = vst.msk [vmem:[#allocation3 + $0x58] sm:$0xff] %vm55, %v190
    %207 = vst.msk [vmem:[#allocation3 + $0x60] sm:$0xff] %vm55, %v191
    %208 = vst.msk [vmem:[#allocation3 + $0x68] sm:$0xff] %vm55, %v192
    %209 = vst.msk [vmem:[#allocation3 + $0x70] sm:$0xff] %vm55, %v193
    %210 = vst.msk [vmem:[#allocation3 + $0x78] sm:$0xff] %vm55, %v194
    %v211 = vld [vmem:[#allocation3] ss:$2 sm:$0xff]
    %s212 = scalar_lea.vmem [#allocation3], 16
    %v213 = vld [vmem:[%s212] ss:$2 sm:$0xff]
    %s214 = scalar_lea.vmem [#allocation3], 32
    %v215 = vld [vmem:[%s214] ss:$2 sm:$0xff]
    %s216 = scalar_lea.vmem [#allocation3], 48
    %v217 = vld [vmem:[%s216] ss:$2 sm:$0xff]
    %s218 = scalar_lea.vmem [#allocation3], 64
    %v219 = vld [vmem:[%s218] ss:$2 sm:$0xff]
    %s220 = scalar_lea.vmem [#allocation3], 80
    %v221 = vld [vmem:[%s220] ss:$2 sm:$0xff]
    %s222 = scalar_lea.vmem [#allocation3], 96
    %v223 = vld [vmem:[%s222] ss:$2 sm:$0xff]
    %s224 = scalar_lea.vmem [#allocation3], 112
    %v225 = vld [vmem:[%s224] ss:$2 sm:$0xff]
    %s226 = scalar_lea.vmem [#allocation3], 1
    %v227 = vld [vmem:[%s226] ss:$2 sm:$0xff]
    %s228 = scalar_lea.vmem [#allocation3], 17
    %v229 = vld [vmem:[%s228] ss:$2 sm:$0xff]
    %s230 = scalar_lea.vmem [#allocation3], 33
    %v231 = vld [vmem:[%s230] ss:$2 sm:$0xff]
    %s232 = scalar_lea.vmem [#allocation3], 49
    %v233 = vld [vmem:[%s232] ss:$2 sm:$0xff]
    %s234 = scalar_lea.vmem [#allocation3], 65
    %v235 = vld [vmem:[%s234] ss:$2 sm:$0xff]
    %s236 = scalar_lea.vmem [#allocation3], 81
    %v237 = vld [vmem:[%s236] ss:$2 sm:$0xff]
    %s238 = scalar_lea.vmem [#allocation3], 97
    %v239 = vld [vmem:[%s238] ss:$2 sm:$0xff]
    %s240 = scalar_lea.vmem [#allocation3], 113
    %v241 = vld [vmem:[%s240] ss:$2 sm:$0xff]
    %v242 = vld [vmem:[%s3] sm:$0x1]
    %v244 = vperm.slane %v242, 0
    %v246 = vmul.f32 %v211, %v244
    %v247 = vmul.f32 %v213, %v244
    %v248 = vmul.f32 %v215, %v244
    %v249 = vmul.f32 %v217, %v244
    %v250 = vmul.f32 %v219, %v244
    %v251 = vmul.f32 %v221, %v244
    %v252 = vmul.f32 %v223, %v244
    %v253 = vmul.f32 %v225, %v244
    %v254 = vsel %vm55, %v246, 0.0
    %255 = vadd.xlane.f32.xlu0 %v254
    %v256 = vpop.xlane.xlu0 %255
    %v257 = vsel %vm55, %v247, 0.0
    %258 = vadd.xlane.f32.xlu0 %v257
    %v259 = vpop.xlane.xlu0 %258
    %v260 = vsel %vm55, %v248, 0.0
    %261 = vadd.xlane.f32.xlu0 %v260
    %v262 = vpop.xlane.xlu0 %261
    %v263 = vsel %vm55, %v249, 0.0
    %264 = vadd.xlane.f32.xlu0 %v263
    %v265 = vpop.xlane.xlu0 %264
    %v266 = vsel %vm55, %v250, 0.0
    %267 = vadd.xlane.f32.xlu0 %v266
    %v268 = vpop.xlane.xlu0 %267
    %v269 = vsel %vm55, %v251, 0.0
    %270 = vadd.xlane.f32.xlu0 %v269
    %v271 = vpop.xlane.xlu0 %270
    %v272 = vsel %vm55, %v252, 0.0
    %273 = vadd.xlane.f32.xlu0 %v272
    %v274 = vpop.xlane.xlu0 %273
    %v275 = vsel %vm55, %v253, 0.0
    %276 = vadd.xlane.f32.xlu0 %v275
    %v277 = vpop.xlane.xlu0 %276
    %v278 = vld [vmem:[%s4] sm:$0x1]
    %v280 = vperm.slane %v278, 0
    %v282 = vmul.f32 %v227, %v280
    %v283 = vmul.f32 %v229, %v280
    %v284 = vmul.f32 %v231, %v280
    %v285 = vmul.f32 %v233, %v280
    %v286 = vmul.f32 %v235, %v280
    %v287 = vmul.f32 %v237, %v280
    %v288 = vmul.f32 %v239, %v280
    %v289 = vmul.f32 %v241, %v280
    %v290 = vsel %vm55, %v282, 0.0
    %291 = vadd.xlane.f32.xlu0 %v290
    %v292 = vpop.xlane.xlu0 %291
    %v293 = vsel %vm55, %v283, 0.0
    %294 = vadd.xlane.f32.xlu0 %v293
    %v295 = vpop.xlane.xlu0 %294
    %v296 = vsel %vm55, %v284, 0.0
    %297 = vadd.xlane.f32.xlu0 %v296
    %v298 = vpop.xlane.xlu0 %297
    %v299 = vsel %vm55, %v285, 0.0
    %300 = vadd.xlane.f32.xlu0 %v299
    %v301 = vpop.xlane.xlu0 %300
    %v302 = vsel %vm55, %v286, 0.0
    %303 = vadd.xlane.f32.xlu0 %v302
    %v304 = vpop.xlane.xlu0 %303
    %v305 = vsel %vm55, %v287, 0.0
    %306 = vadd.xlane.f32.xlu0 %v305
    %v307 = vpop.xlane.xlu0 %306
    %v308 = vsel %vm55, %v288, 0.0
    %309 = vadd.xlane.f32.xlu0 %v308
    %v310 = vpop.xlane.xlu0 %309
    %v311 = vsel %vm55, %v289, 0.0
    %312 = vadd.xlane.f32.xlu0 %v311
    %v313 = vpop.xlane.xlu0 %312
    %v314 = vadd.f32 %v256, %v292
    %v315 = vadd.f32 %v259, %v295
    %v316 = vadd.f32 %v262, %v298
    %v317 = vadd.f32 %v265, %v301
    %v318 = vadd.f32 %v268, %v304
    %v319 = vadd.f32 %v271, %v307
    %v320 = vadd.f32 %v274, %v310
    %v321 = vadd.f32 %v277, %v313
    %s322 = sld [smem:[#allocation4]]
    %v323 = vstv %s322
    %v324 = vadd.f32 %v314, %v323
    %v325 = vadd.f32 %v315, %v323
    %v326 = vadd.f32 %v316, %v323
    %v327 = vadd.f32 %v317, %v323
    %v328 = vadd.f32 %v318, %v323
    %v329 = vadd.f32 %v319, %v323
    %v330 = vadd.f32 %v320, %v323
    %v331 = vadd.f32 %v321, %v323
    %v332 = vmax.f32 %v324, -30.0
    %v333 = vmax.f32 %v325, -30.0
    %v334 = vmax.f32 %v326, -30.0
    %v335 = vmax.f32 %v327, -30.0
    %v336 = vmax.f32 %v328, -30.0
    %v337 = vmax.f32 %v329, -30.0
    %v338 = vmax.f32 %v330, -30.0
    %v339 = vmax.f32 %v331, -30.0
    %v340 = vmin.f32 %v332, 30.0
    %v341 = vmin.f32 %v333, 30.0
    %v342 = vmin.f32 %v334, 30.0
    %v343 = vmin.f32 %v335, 30.0
    %v344 = vmin.f32 %v336, 30.0
    %v345 = vmin.f32 %v337, 30.0
    %v346 = vmin.f32 %v338, 30.0
    %v347 = vmin.f32 %v339, 30.0
    %v348 = vsub.f32 0.0, %v340
    %v349 = vsub.f32 0.0, %v341
    %v350 = vsub.f32 0.0, %v342
    %v351 = vsub.f32 0.0, %v343
    %v352 = vsub.f32 0.0, %v344
    %v353 = vsub.f32 0.0, %v345
    %v354 = vsub.f32 0.0, %v346
    %v355 = vsub.f32 0.0, %v347
    %v356 = vmul.f32 %v348, 1.442695
    %v357 = vpow.pop %v356
    %v358 = vmul.f32 %v349, 1.442695
    %v359 = vpow.pop %v358
    %v360 = vmul.f32 %v350, 1.442695
    %v361 = vpow.pop %v360
    %v362 = vmul.f32 %v351, 1.442695
    %v363 = vpow.pop %v362
    %v364 = vmul.f32 %v352, 1.442695
    %v365 = vpow.pop %v364
    %v366 = vmul.f32 %v353, 1.442695
    %v367 = vpow.pop %v366
    %v368 = vmul.f32 %v354, 1.442695
    %v369 = vpow.pop %v368
    %v370 = vmul.f32 %v355, 1.442695
    %v371 = vpow.pop %v370
    %v372 = vadd.f32 %v357, 1.0
    %v373 = vadd.f32 %v359, 1.0
    %v374 = vadd.f32 %v361, 1.0
    %v375 = vadd.f32 %v363, 1.0
    %v376 = vadd.f32 %v365, 1.0
    %v377 = vadd.f32 %v367, 1.0
    %v378 = vadd.f32 %v369, 1.0
    %v379 = vadd.f32 %v371, 1.0
    %v380 = vrcp.pop %v372
    %v381 = vmul.f32 %v372, %v380
    %v382 = vsub.f32 1.0, %v381
    %v383 = vmul.f32 %v380, %v382
    %v384 = vadd.f32 %v380, %v383
    %vm385 = vweird.f32 %v372
    %vm386 = vweird.f32 %v380
    %vm387 = vmor %vm385, %vm386
    %v388 = vsel %vm387, %v380, %v384
    %v389 = vand.u32 2147483647, %v372
    %vm390 = vcmp.eq.f32.partialorder %v389, 8.507059e+37
    %v391 = vand.u32 %v372, 2147483648
    %v392 = vor.u32 1.1754944e-38, %v391
    %v393 = vsel %vm390, %v392, %v388
    %v394 = vmul.f32 1.0, %v393
    %v395 = vrcp.pop %v373
    %v396 = vmul.f32 %v373, %v395
    %v397 = vsub.f32 1.0, %v396
    %v398 = vmul.f32 %v395, %v397
    %v399 = vadd.f32 %v395, %v398
    %vm400 = vweird.f32 %v373
    %vm401 = vweird.f32 %v395
    %vm402 = vmor %vm400, %vm401
    %v403 = vsel %vm402, %v395, %v399
    %v404 = vand.u32 2147483647, %v373
    %vm405 = vcmp.eq.f32.partialorder %v404, 8.507059e+37
    %v406 = vand.u32 %v373, 2147483648
    %v407 = vor.u32 1.1754944e-38, %v406
    %v408 = vsel %vm405, %v407, %v403
    %v409 = vmul.f32 1.0, %v408
    %v410 = vrcp.pop %v374
    %v411 = vmul.f32 %v374, %v410
    %v412 = vsub.f32 1.0, %v411
    %v413 = vmul.f32 %v410, %v412
    %v414 = vadd.f32 %v410, %v413
    %vm415 = vweird.f32 %v374
    %vm416 = vweird.f32 %v410
    %vm417 = vmor %vm415, %vm416
    %v418 = vsel %vm417, %v410, %v414
    %v419 = vand.u32 2147483647, %v374
    %vm420 = vcmp.eq.f32.partialorder %v419, 8.507059e+37
    %v421 = vand.u32 %v374, 2147483648
    %v422 = vor.u32 1.1754944e-38, %v421
    %v423 = vsel %vm420, %v422, %v418
    %v424 = vmul.f32 1.0, %v423
    %v425 = vrcp.pop %v375
    %v426 = vmul.f32 %v375, %v425
    %v427 = vsub.f32 1.0, %v426
    %v428 = vmul.f32 %v425, %v427
    %v429 = vadd.f32 %v425, %v428
    %vm430 = vweird.f32 %v375
    %vm431 = vweird.f32 %v425
    %vm432 = vmor %vm430, %vm431
    %v433 = vsel %vm432, %v425, %v429
    %v434 = vand.u32 2147483647, %v375
    %vm435 = vcmp.eq.f32.partialorder %v434, 8.507059e+37
    %v436 = vand.u32 %v375, 2147483648
    %v437 = vor.u32 1.1754944e-38, %v436
    %v438 = vsel %vm435, %v437, %v433
    %v439 = vmul.f32 1.0, %v438
    %v440 = vrcp.pop %v376
    %v441 = vmul.f32 %v376, %v440
    %v442 = vsub.f32 1.0, %v441
    %v443 = vmul.f32 %v440, %v442
    %v444 = vadd.f32 %v440, %v443
    %vm445 = vweird.f32 %v376
    %vm446 = vweird.f32 %v440
    %vm447 = vmor %vm445, %vm446
    %v448 = vsel %vm447, %v440, %v444
    %v449 = vand.u32 2147483647, %v376
    %vm450 = vcmp.eq.f32.partialorder %v449, 8.507059e+37
    %v451 = vand.u32 %v376, 2147483648
    %v452 = vor.u32 1.1754944e-38, %v451
    %v453 = vsel %vm450, %v452, %v448
    %v454 = vmul.f32 1.0, %v453
    %v455 = vrcp.pop %v377
    %v456 = vmul.f32 %v377, %v455
    %v457 = vsub.f32 1.0, %v456
    %v458 = vmul.f32 %v455, %v457
    %v459 = vadd.f32 %v455, %v458
    %vm460 = vweird.f32 %v377
    %vm461 = vweird.f32 %v455
    %vm462 = vmor %vm460, %vm461
    %v463 = vsel %vm462, %v455, %v459
    %v464 = vand.u32 2147483647, %v377
    %vm465 = vcmp.eq.f32.partialorder %v464, 8.507059e+37
    %v466 = vand.u32 %v377, 2147483648
    %v467 = vor.u32 1.1754944e-38, %v466
    %v468 = vsel %vm465, %v467, %v463
    %v469 = vmul.f32 1.0, %v468
    %v470 = vrcp.pop %v378
    %v471 = vmul.f32 %v378, %v470
    %v472 = vsub.f32 1.0, %v471
    %v473 = vmul.f32 %v470, %v472
    %v474 = vadd.f32 %v470, %v473
    %vm475 = vweird.f32 %v378
    %vm476 = vweird.f32 %v470
    %vm477 = vmor %vm475, %vm476
    %v478 = vsel %vm477, %v470, %v474
    %v479 = vand.u32 2147483647, %v378
    %vm480 = vcmp.eq.f32.partialorder %v479, 8.507059e+37
    %v481 = vand.u32 %v378, 2147483648
    %v482 = vor.u32 1.1754944e-38, %v481
    %v483 = vsel %vm480, %v482, %v478
    %v484 = vmul.f32 1.0, %v483
    %v485 = vrcp.pop %v379
    %v486 = vmul.f32 %v379, %v485
    %v487 = vsub.f32 1.0, %v486
    %v488 = vmul.f32 %v485, %v487
    %v489 = vadd.f32 %v485, %v488
    %vm490 = vweird.f32 %v379
    %vm491 = vweird.f32 %v485
    %vm492 = vmor %vm490, %vm491
    %v493 = vsel %vm492, %v485, %v489
    %v494 = vand.u32 2147483647, %v379
    %vm495 = vcmp.eq.f32.partialorder %v494, 8.507059e+37
    %v496 = vand.u32 %v379, 2147483648
    %v497 = vor.u32 1.1754944e-38, %v496
    %v498 = vsel %vm495, %v497, %v493
    %v499 = vmul.f32 1.0, %v498
    %v500 = vadd.f32 %v211, %v227
    %v501 = vadd.f32 %v213, %v229
    %v502 = vadd.f32 %v215, %v231
    %v503 = vadd.f32 %v217, %v233
    %v504 = vadd.f32 %v219, %v235
    %v505 = vadd.f32 %v221, %v237
    %v506 = vadd.f32 %v223, %v239
    %v507 = vadd.f32 %v225, %v241
    %v508 = vmul.f32 %v500, %v394
    %v509 = vmul.f32 %v501, %v409
    %v510 = vmul.f32 %v502, %v424
    %v511 = vmul.f32 %v503, %v439
    %v512 = vmul.f32 %v504, %v454
    %v513 = vmul.f32 %v505, %v469
    %v514 = vmul.f32 %v506, %v484
    %v515 = vmul.f32 %v507, %v499
    %v516 = vmul.f32 %v508, %v508
    %v517 = vmul.f32 %v509, %v509
    %v518 = vmul.f32 %v510, %v510
    %v519 = vmul.f32 %v511, %v511
    %v520 = vsel %vm55, %v516, 0.0
    %521 = vadd.xlane.f32.xlu0 %v520
    %v522 = vpop.xlane.xlu0 %521
    %v523 = vsel %vm55, %v517, 0.0
    %524 = vadd.xlane.f32.xlu0 %v523
    %v525 = vpop.xlane.xlu0 %524
    %v526 = vsel %vm55, %v518, 0.0
    %527 = vadd.xlane.f32.xlu0 %v526
    %v528 = vpop.xlane.xlu0 %527
    %v529 = vsel %vm55, %v519, 0.0
    %530 = vadd.xlane.f32.xlu0 %v529
    %v531 = vpop.xlane.xlu0 %530
    %v532 = vpack.c.bf16 %v508, %v508
    %v533 = vpack.c.bf16 %v509, %v509
    %v534 = vpack.c.bf16 %v510, %v510
    %v535 = vpack.c.bf16 %v511, %v511
    %v536 = vpack.c.bf16 %v512, %v512
    %v537 = vpack.c.bf16 %v513, %v513
    %v538 = vpack.c.bf16 %v514, %v514
    %v539 = vpack.c.bf16 %v515, %v515
    %v544 = vunpack.c.l.b16 %v532
    %v545 = vunpack.c.l.b16 %v533
    %v546 = vunpack.c.l.b16 %v534
    %v547 = vunpack.c.l.b16 %v535
    %v548 = vpack.c.b16 %v545, %v544
    %v549 = vpack.c.b16 %v547, %v546
    %v554 = vunpack.c.l.b16 %v536
    %v555 = vunpack.c.l.b16 %v537
    %v556 = vunpack.c.l.b16 %v538
    %v557 = vunpack.c.l.b16 %v539
    %v558 = vpack.c.b16 %v555, %v554
    %v559 = vpack.c.b16 %v557, %v556
    %v561 = vsel %vm55, %v548, 0
    %v564 = vsel %vm55, %v549, 0
    %v567 = vsel %vm55, %v558, 0
    %v570 = vsel %vm55, %v559, 0
    %572 = vmatpush.bf16.xpose.msra.mxu0 0
    %573 = vmatpush.bf16.xpose.msra.mxu0 0
    %574 = vmatpush.bf16.xpose.msra.mxu0 0
    %575 = vmatpush.bf16.xpose.msra.mxu0 0
    %576 = vmatpush.bf16.xpose.msra.mxu0 %v570
    %577 = vmatpush.bf16.xpose.msra.mxu0 %v567
    %578 = vmatpush.bf16.xpose.msra.mxu0 %v564
    %579 = vmatpush.bf16.xpose.msra.mxu0 %v561
    %580 = vmatmul.bf16.gmra.mxu0 %v561
    %v581 = vpop.f32.mrf.mxu0
    %v582 = vadd.f32 0.0, %v581
    %v583 = vpop.f32.mrf.mxu0
    %v584 = vadd.f32 0.0, %v583
    %585 = vmatmul.bf16.gmra.mxu0 %v564
    %v586 = vpop.f32.mrf.mxu0
    %v587 = vadd.f32 0.0, %v586
    %v588 = vpop.f32.mrf.mxu0
    %v589 = vadd.f32 0.0, %v588
    %590 = vdwg.mxu0
    %v591 = vmul.f32 %v512, %v512
    %v592 = vmul.f32 %v513, %v513
    %v593 = vmul.f32 %v514, %v514
    %v594 = vmul.f32 %v515, %v515
    %v595 = vpack.c.bf16 %v517, %v516
    %v596 = vpack.c.bf16 %v519, %v518
    %v597 = vpack.c.bf16 %v592, %v591
    %v598 = vpack.c.bf16 %v594, %v593
    %v600 = vsel %vm55, 1065369472, 0
    %v603 = vsel %vm55, %v595, 0
    %v606 = vsel %vm55, %v596, 0
    %v609 = vsel %vm55, %v597, 0
    %v612 = vsel %vm55, %v598, 0
    %614 = vmatpush.bf16.xpose.msra.mxu0 0
    %615 = vmatpush.bf16.xpose.msra.mxu0 0
    %616 = vmatpush.bf16.xpose.msra.mxu0 0
    %617 = vmatpush.bf16.xpose.msra.mxu0 0
    %618 = vmatpush.bf16.xpose.msra.mxu0 %v612
    %619 = vmatpush.bf16.xpose.msra.mxu0 %v609
    %620 = vmatpush.bf16.xpose.msra.mxu0 %v606
    %621 = vmatpush.bf16.xpose.msra.mxu0 %v603
    %622 = vmatmul.bf16.gmra.mxu0 %v600
    %v623 = vpop.f32.mrf.mxu0
    %v624 = vadd.f32 0.0, %v623
    %v625 = vpop.f32.mrf.mxu0
    %626 = vdwg.mxu0
    %v627 = vmul.f32 %v582, 2.0
    %v628 = vmul.f32 %v584, 2.0
    %v629 = vmul.f32 %v587, 2.0
    %v630 = vmul.f32 %v589, 2.0
    %v631 = vperm.slane %v624, 0
    %v632 = vsub.f32 %v631, %v627
    %v633 = vsub.f32 %v631, %v628
    %v634 = vsub.f32 %v631, %v629
    %v635 = vsub.f32 %v631, %v630
    %v636 = vlaneseq
    %v637 = vand.u32 %v636, 127
    %vm638 = vcmp.lt.s32.totalorder %v637, 32
    %v639 = vsel %vm638, %v632, -1e+30
    %v640 = vsel %vm638, %v633, -1e+30
    %v641 = vsel %vm638, %v634, -1e+30
    %v642 = vsel %vm638, %v635, -1e+30
    %vm643 = vcmask 523264
    %v644 = vsel %vm643, %v639, -inf
    %645 = vmax.xlane.f32.xlu0 %v644
    %v646 = vpop.xlane.xlu0 %645
    %v647 = vsel %vm643, %v640, -inf
    %648 = vmax.xlane.f32.xlu0 %v647
    %v649 = vpop.xlane.xlu0 %648
    %v650 = vsel %vm643, %v641, -inf
    %651 = vmax.xlane.f32.xlu0 %v650
    %v652 = vpop.xlane.xlu0 %651
    %v653 = vsel %vm643, %v642, -inf
    %654 = vmax.xlane.f32.xlu0 %v653
    %v655 = vpop.xlane.xlu0 %654
    %vm656 = vcmp.eq.f32.partialorder %v639, %v646
    %vm657 = vcmp.eq.f32.partialorder %v640, %v649
    %vm658 = vcmp.eq.f32.partialorder %v641, %v652
    %vm659 = vcmp.eq.f32.partialorder %v642, %v655
    %v660 = vsel %vm656, -1e+30, %v639
    %v661 = vsel %vm657, -1e+30, %v640
    %v662 = vsel %vm658, -1e+30, %v641
    %v663 = vsel %vm659, -1e+30, %v642
    %v664 = vsel %vm643, %v660, -inf
    %665 = vmax.xlane.f32.xlu0 %v664
    %v666 = vpop.xlane.xlu0 %665
    %v667 = vsel %vm643, %v661, -inf
    %668 = vmax.xlane.f32.xlu0 %v667
    %v669 = vpop.xlane.xlu0 %668
    %v670 = vsel %vm643, %v662, -inf
    %671 = vmax.xlane.f32.xlu0 %v670
    %v672 = vpop.xlane.xlu0 %671
    %v673 = vsel %vm643, %v663, -inf
    %674 = vmax.xlane.f32.xlu0 %v673
    %v675 = vpop.xlane.xlu0 %674
    %vm676 = vcmp.eq.f32.partialorder %v660, %v666
    %vm677 = vcmp.eq.f32.partialorder %v661, %v669
    %vm678 = vcmp.eq.f32.partialorder %v662, %v672
    %vm679 = vcmp.eq.f32.partialorder %v663, %v675
    %v680 = vsel %vm676, -1e+30, %v660
    %v681 = vsel %vm677, -1e+30, %v661
    %v682 = vsel %vm678, -1e+30, %v662
    %v683 = vsel %vm679, -1e+30, %v663
    %v684 = vsel %vm643, %v680, -inf
    %685 = vmax.xlane.f32.xlu0 %v684
    %v686 = vpop.xlane.xlu0 %685
    %v687 = vsel %vm643, %v681, -inf
    %688 = vmax.xlane.f32.xlu0 %v687
    %v689 = vpop.xlane.xlu0 %688
    %v690 = vsel %vm643, %v682, -inf
    %691 = vmax.xlane.f32.xlu0 %v690
    %v692 = vpop.xlane.xlu0 %691
    %v693 = vsel %vm643, %v683, -inf
    %694 = vmax.xlane.f32.xlu0 %v693
    %v695 = vpop.xlane.xlu0 %694
    %v696 = vadd.f32 %v686, %v522
    %v697 = vadd.f32 %v689, %v525
    %v698 = vadd.f32 %v692, %v528
    %v699 = vadd.f32 %v695, %v531
    %v700 = vmax.f32 %v696, 0.0
    %v701 = vmax.f32 %v697, 0.0
    %v702 = vmax.f32 %v698, 0.0
    %v703 = vmax.f32 %v699, 0.0
    %v704 = vrsqrt.pop %v700
    %v705 = vmul.f32 %v704, %v700
    %v706 = vmul.f32 %v705, %v704
    %v707 = vmul.f32 0.5, %v706
    %v708 = vsub.f32 1.5, %v707
    %v709 = vmul.f32 %v704, %v708
    %v710 = vmul.f32 %v700, %v709
    %vm711 = vcmp.eq.f32.partialorder %v700, inf
    %v712 = vsel %vm711, %v700, %v710
    %vm713 = vcmp.eq.f32.partialorder %v700, 0.0
    %v714 = vand.u32 %v700, 2147483648
    %v715 = vsel %vm713, %v714, %v712
    %v716 = vrsqrt.pop %v701
    %v717 = vmul.f32 %v716, %v701
    %v718 = vmul.f32 %v717, %v716
    %v719 = vmul.f32 0.5, %v718
    %v720 = vsub.f32 1.5, %v719
    %v721 = vmul.f32 %v716, %v720
    %v722 = vmul.f32 %v701, %v721
    %vm723 = vcmp.eq.f32.partialorder %v701, inf
    %v724 = vsel %vm723, %v701, %v722
    %vm725 = vcmp.eq.f32.partialorder %v701, 0.0
    %v726 = vand.u32 %v701, 2147483648
    %v727 = vsel %vm725, %v726, %v724
    %v728 = vrsqrt.pop %v702
    %v729 = vmul.f32 %v728, %v702
    %v730 = vmul.f32 %v729, %v728
    %v731 = vmul.f32 0.5, %v730
    %v732 = vsub.f32 1.5, %v731
    %v733 = vmul.f32 %v728, %v732
    %v734 = vmul.f32 %v702, %v733
    %vm735 = vcmp.eq.f32.partialorder %v702, inf
    %v736 = vsel %vm735, %v702, %v734
    %vm737 = vcmp.eq.f32.partialorder %v702, 0.0
    %v738 = vand.u32 %v702, 2147483648
    %v739 = vsel %vm737, %v738, %v736
    %v740 = vrsqrt.pop %v703
    %v741 = vmul.f32 %v740, %v703
    %v742 = vmul.f32 %v741, %v740
    %v743 = vmul.f32 0.5, %v742
    %v744 = vsub.f32 1.5, %v743
    %v745 = vmul.f32 %v740, %v744
    %v746 = vmul.f32 %v703, %v745
    %vm747 = vcmp.eq.f32.partialorder %v703, inf
    %v748 = vsel %vm747, %v703, %v746
    %vm749 = vcmp.eq.f32.partialorder %v703, 0.0
    %v750 = vand.u32 %v703, 2147483648
    %v751 = vsel %vm749, %v750, %v748
    %vm752 = vcmp.ge.s32.totalorder %v637, 32
    %v753 = vsel %vm752, %v632, -1e+30
    %v754 = vsel %vm752, %v633, -1e+30
    %v755 = vsel %vm752, %v634, -1e+30
    %v756 = vsel %vm752, %v635, -1e+30
    %v757 = vsel %vm643, %v753, -inf
    %758 = vmax.xlane.f32.xlu0 %v757
    %v759 = vpop.xlane.xlu0 %758
    %v760 = vsel %vm643, %v754, -inf
    %761 = vmax.xlane.f32.xlu0 %v760
    %v762 = vpop.xlane.xlu0 %761
    %v763 = vsel %vm643, %v755, -inf
    %764 = vmax.xlane.f32.xlu0 %v763
    %v765 = vpop.xlane.xlu0 %764
    %v766 = vsel %vm643, %v756, -inf
    %767 = vmax.xlane.f32.xlu0 %v766
    %v768 = vpop.xlane.xlu0 %767
    %vm769 = vcmp.eq.f32.partialorder %v753, %v759
    %vm770 = vcmp.eq.f32.partialorder %v754, %v762
    %vm771 = vcmp.eq.f32.partialorder %v755, %v765
    %vm772 = vcmp.eq.f32.partialorder %v756, %v768
    %v773 = vsel %vm769, -1e+30, %v753
    %v774 = vsel %vm770, -1e+30, %v754
    %v775 = vsel %vm771, -1e+30, %v755
    %v776 = vsel %vm772, -1e+30, %v756
    %v777 = vsel %vm643, %v773, -inf
    %778 = vmax.xlane.f32.xlu0 %v777
    %v779 = vpop.xlane.xlu0 %778
    %v780 = vsel %vm643, %v774, -inf
    %781 = vmax.xlane.f32.xlu0 %v780
    %v782 = vpop.xlane.xlu0 %781
    %v783 = vsel %vm643, %v775, -inf
    %784 = vmax.xlane.f32.xlu0 %v783
    %v785 = vpop.xlane.xlu0 %784
    %v786 = vsel %vm643, %v776, -inf
    %787 = vmax.xlane.f32.xlu0 %v786
    %v788 = vpop.xlane.xlu0 %787
    %vm789 = vcmp.eq.f32.partialorder %v773, %v779
    %vm790 = vcmp.eq.f32.partialorder %v774, %v782
    %vm791 = vcmp.eq.f32.partialorder %v775, %v785
    %vm792 = vcmp.eq.f32.partialorder %v776, %v788
    %v793 = vsel %vm789, -1e+30, %v773
    %v794 = vsel %vm790, -1e+30, %v774
    %v795 = vsel %vm791, -1e+30, %v775
    %v796 = vsel %vm792, -1e+30, %v776
    %v797 = vsel %vm643, %v793, -inf
    %798 = vmax.xlane.f32.xlu0 %v797
    %v799 = vpop.xlane.xlu0 %798
    %v800 = vsel %vm643, %v794, -inf
    %801 = vmax.xlane.f32.xlu0 %v800
    %v802 = vpop.xlane.xlu0 %801
    %v803 = vsel %vm643, %v795, -inf
    %804 = vmax.xlane.f32.xlu0 %v803
    %v805 = vpop.xlane.xlu0 %804
    %v806 = vsel %vm643, %v796, -inf
    %807 = vmax.xlane.f32.xlu0 %v806
    %v808 = vpop.xlane.xlu0 %807
    %v809 = vadd.f32 %v799, %v522
    %v810 = vadd.f32 %v802, %v525
    %v811 = vadd.f32 %v805, %v528
    %v812 = vadd.f32 %v808, %v531
    %v813 = vmax.f32 %v809, 0.0
    %v814 = vmax.f32 %v810, 0.0
    %v815 = vmax.f32 %v811, 0.0
    %v816 = vmax.f32 %v812, 0.0
    %v817 = vrsqrt.pop %v813
    %v818 = vmul.f32 %v817, %v813
    %v819 = vmul.f32 %v818, %v817
    %v820 = vmul.f32 0.5, %v819
    %v821 = vsub.f32 1.5, %v820
    %v822 = vmul.f32 %v817, %v821
    %v823 = vmul.f32 %v813, %v822
    %vm824 = vcmp.eq.f32.partialorder %v813, inf
    %v825 = vsel %vm824, %v813, %v823
    %vm826 = vcmp.eq.f32.partialorder %v813, 0.0
    %v827 = vand.u32 %v813, 2147483648
    %v828 = vsel %vm826, %v827, %v825
    %v829 = vrsqrt.pop %v814
    %v830 = vmul.f32 %v829, %v814
    %v831 = vmul.f32 %v830, %v829
    %v832 = vmul.f32 0.5, %v831
    %v833 = vsub.f32 1.5, %v832
    %v834 = vmul.f32 %v829, %v833
    %v835 = vmul.f32 %v814, %v834
    %vm836 = vcmp.eq.f32.partialorder %v814, inf
    %v837 = vsel %vm836, %v814, %v835
    %vm838 = vcmp.eq.f32.partialorder %v814, 0.0
    %v839 = vand.u32 %v814, 2147483648
    %v840 = vsel %vm838, %v839, %v837
    %v841 = vrsqrt.pop %v815
    %v842 = vmul.f32 %v841, %v815
    %v843 = vmul.f32 %v842, %v841
    %v844 = vmul.f32 0.5, %v843
    %v845 = vsub.f32 1.5, %v844
    %v846 = vmul.f32 %v841, %v845
    %v847 = vmul.f32 %v815, %v846
    %vm848 = vcmp.eq.f32.partialorder %v815, inf
    %v849 = vsel %vm848, %v815, %v847
    %vm850 = vcmp.eq.f32.partialorder %v815, 0.0
    %v851 = vand.u32 %v815, 2147483648
    %v852 = vsel %vm850, %v851, %v849
    %v853 = vrsqrt.pop %v816
    %v854 = vmul.f32 %v853, %v816
    %v855 = vmul.f32 %v854, %v853
    %v856 = vmul.f32 0.5, %v855
    %v857 = vsub.f32 1.5, %v856
    %v858 = vmul.f32 %v853, %v857
    %v859 = vmul.f32 %v816, %v858
    %vm860 = vcmp.eq.f32.partialorder %v816, inf
    %v861 = vsel %vm860, %v816, %v859
    %vm862 = vcmp.eq.f32.partialorder %v816, 0.0
    %v863 = vand.u32 %v816, 2147483648
    %v864 = vsel %vm862, %v863, %v861
    %v865 = vsub.f32 %v715, %v828
    %v866 = vsub.f32 %v727, %v840
    %v867 = vsub.f32 %v739, %v852
    %v868 = vsub.f32 %v751, %v864
    %v869 = vmul.f32 %v865, -1.0
    %v870 = vmul.f32 %v866, -1.0
    %v871 = vmul.f32 %v867, -1.0
    %v872 = vmul.f32 %v868, -1.0
    %v873 = vmin.f32 %v869, 60.0
    %v874 = vmin.f32 %v870, 60.0
    %v875 = vmin.f32 %v871, 60.0
    %v876 = vmin.f32 %v872, 60.0
    %v877 = vsub.f32 0.0, %v394
    %v878 = vsub.f32 0.0, %v409
    %v879 = vsub.f32 0.0, %v424
    %v880 = vsub.f32 0.0, %v439
    %v881 = vmul.f32 %v873, 1.442695
    %v882 = vpow.pop %v881
    %v883 = vmul.f32 %v874, 1.442695
    %v884 = vpow.pop %v883
    %v885 = vmul.f32 %v875, 1.442695
    %v886 = vpow.pop %v885
    %v887 = vmul.f32 %v876, 1.442695
    %v888 = vpow.pop %v887
    %v889 = vmul.f32 %v877, %v882
    %v890 = vmul.f32 %v878, %v884
    %v891 = vmul.f32 %v879, %v886
    %v892 = vmul.f32 %v880, %v888
    %vm893 = vcmask 7168
    %v894 = vsel %vm893, %v889, 0.0
    %v895 = vsel %vm893, %v890, 0.0
    %v896 = vadd.f32 %v894, %v895
    %v897 = vsel %vm893, %v891, 0.0
    %v898 = vadd.f32 %v896, %v897
    %v899 = vsel %vm893, %v892, 0.0
    %v900 = vadd.f32 %v898, %v899
    %901 = vadd.xlane.f32.xlu0 %v900
    %v902 = vpop.xlane.xlu0 %901
    %v903 = vrot.slane %v902, 4
    %v904 = vadd.f32 %v902, %v903
    %v905 = vrot.slane %v904, 2
    %v906 = vadd.f32 %v904, %v905
    %v907 = vrot.slane %v906, 1
    %v908 = vadd.f32 %v906, %v907
    %s909 = vtos %v908
    %v910 = vrcp.pop 32.0
    %v911 = vmul.f32 32.0, %v910
    %v912 = vsub.f32 1.0, %v911
    %v913 = vmul.f32 %v910, %v912
    %v914 = vadd.f32 %v910, %v913
    %vm915 = vweird.f32 %v910
    %v916 = vsel %vm915, %v910, %v914
    %s917 = vtos %v916
    %s918 = smul.f32 %s909, %s917
    %v919 = vmul.f32 %v394, %v394
    %v920 = vmul.f32 %v409, %v409
    %v921 = vmul.f32 %v424, %v424
    %v922 = vmul.f32 %v439, %v439
    %v923 = vsel %vm893, %v919, 0.0
    %v924 = vsel %vm893, %v920, 0.0
    %v925 = vadd.f32 %v923, %v924
    %v926 = vsel %vm893, %v921, 0.0
    %v927 = vadd.f32 %v925, %v926
    %v928 = vsel %vm893, %v922, 0.0
    %v929 = vadd.f32 %v927, %v928
    %930 = vadd.xlane.f32.xlu0 %v929
    %v931 = vpop.xlane.xlu0 %930
    %v932 = vrot.slane %v931, 4
    %v933 = vadd.f32 %v931, %v932
    %v934 = vrot.slane %v933, 2
    %v935 = vadd.f32 %v933, %v934
    %v936 = vrot.slane %v935, 1
    %v937 = vadd.f32 %v935, %v936
    %s938 = vtos %v937
    %v939 = vrcp.pop 32.0
    %v940 = vmul.f32 32.0, %v939
    %v941 = vsub.f32 1.0, %v940
    %v942 = vmul.f32 %v939, %v941
    %v943 = vadd.f32 %v939, %v942
    %vm944 = vweird.f32 %v939
    %v945 = vsel %vm944, %v939, %v943
    %s946 = vtos %v945
    %s947 = smul.f32 %s938, %s946
    %s948 = sadd.f32 %s918, %s947
    %s949 = sadd.f32 %s948, 0.0
    %950 = vst.msk [vmem:[#allocation2] sm:$0xff] %vm55, %v508
    %951 = vst.msk [vmem:[#allocation2 + $0x8] sm:$0xff] %vm55, %v509
    %952 = vst.msk [vmem:[#allocation2 + $0x10] sm:$0xff] %vm55, %v510
    %953 = vst.msk [vmem:[#allocation2 + $0x18] sm:$0xff] %vm55, %v511
    %954 = vst.msk [vmem:[#allocation2 + $0x20] sm:$0xff] %vm55, %v512
    %955 = vst.msk [vmem:[#allocation2 + $0x28] sm:$0xff] %vm55, %v513
    %956 = vst.msk [vmem:[#allocation2 + $0x30] sm:$0xff] %vm55, %v514
    %957 = vst.msk [vmem:[#allocation2 + $0x38] sm:$0xff] %vm55, %v515
    %v958 = vld [vmem:[#allocation2] sm:$0xff]
    %v959 = vld [vmem:[#allocation2 + $0x8] sm:$0xff]
    %v960 = vld [vmem:[#allocation2 + $0x10] sm:$0xff]
    %v961 = vld [vmem:[#allocation2 + $0x18] sm:$0xff]
    %v962 = vld [vmem:[#allocation2 + $0x20] sm:$0xff]
    %v963 = vld [vmem:[#allocation2 + $0x28] sm:$0xff]
    %v964 = vld [vmem:[#allocation2 + $0x30] sm:$0xff]
    %v965 = vld [vmem:[#allocation2 + $0x38] sm:$0xff]
    %s966 = scalar_lea.vmem %s1, 32
    %v967 = vld [vmem:[%s966] sm:$0xff]
    %v968 = vld [vmem:[%s966 + $0x8] sm:$0xff]
    %v969 = vld [vmem:[%s966 + $0x10] sm:$0xff]
    %v970 = vld [vmem:[%s966 + $0x18] sm:$0xff]
    %v971 = vpack.c.bf16 %v968, %v967
    %v972 = vpack.c.bf16 %v970, %v969
    %v973 = vpack.c.bf16 %v959, %v958
    %v974 = vpack.c.bf16 %v961, %v960
    %v975 = vpack.c.bf16 %v963, %v962
    %v976 = vpack.c.bf16 %v965, %v964
    %s977 = scalar_lea.vmem %s2, 1
    %v978 = vld [vmem:[%s977] sm:$0x1]
    %v980 = vperm.slane %v978, 0
    %v983 = vsel %vm55, %v973, 0
    %v986 = vsel %vm55, %v974, 0
    %v989 = vsel %vm55, %v975, 0
    %v992 = vsel %vm55, %v976, 0
    %994 = vmatpush.bf16.msra.mxu0 0
    %995 = vmatpush.bf16.msra.mxu0 0
    %996 = vmatpush.bf16.msra.mxu0 0
    %997 = vmatpush.bf16.msra.mxu0 0
    %998 = vmatpush.bf16.msra.mxu0 0
    %999 = vmatpush.bf16.msra.mxu0 0
    %1000 = vmatpush.bf16.msra.mxu0 %v972
    %1001 = vmatpush.bf16.msra.mxu0 %v971
    %1002 = vmatmul.bf16.gmra.mxu0 %v983
    %v1003 = vpop.f32.mrf.mxu0
    %v1004 = vadd.f32 %v980, %v1003
    %v1005 = vpop.f32.mrf.mxu0
    %v1006 = vadd.f32 %v980, %v1005
    %1007 = vmatmul.bf16.gmra.mxu0 %v986
    %v1008 = vpop.f32.mrf.mxu0
    %v1009 = vadd.f32 %v980, %v1008
    %v1010 = vpop.f32.mrf.mxu0
    %v1011 = vadd.f32 %v980, %v1010
    %1012 = vmatmul.bf16.gmra.mxu0 %v989
    %v1013 = vpop.f32.mrf.mxu0
    %v1014 = vadd.f32 %v980, %v1013
    %v1015 = vpop.f32.mrf.mxu0
    %v1016 = vadd.f32 %v980, %v1015
    %1017 = vmatmul.bf16.gmra.mxu0 %v992
    %v1018 = vpop.f32.mrf.mxu0
    %v1019 = vadd.f32 %v980, %v1018
    %v1020 = vpop.f32.mrf.mxu0
    %v1021 = vadd.f32 %v980, %v1020
    %1022 = vdwg.mxu0
    %v1023 = vmax.f32 %v1004, 0.0
    %v1024 = vmax.f32 %v1006, 0.0
    %v1025 = vmax.f32 %v1009, 0.0
    %v1026 = vmax.f32 %v1011, 0.0
    %v1027 = vmax.f32 %v1014, 0.0
    %v1028 = vmax.f32 %v1016, 0.0
    %v1029 = vmax.f32 %v1019, 0.0
    %v1030 = vmax.f32 %v1021, 0.0
    %1031 = vst.msk [vmem:[#allocation3] sm:$0xff] %vm55, %v1023
    %1032 = vst.msk [vmem:[#allocation3 + $0x8] sm:$0xff] %vm55, %v1024
    %1033 = vst.msk [vmem:[#allocation3 + $0x10] sm:$0xff] %vm55, %v1025
    %1034 = vst.msk [vmem:[#allocation3 + $0x18] sm:$0xff] %vm55, %v1026
    %1035 = vst.msk [vmem:[#allocation3 + $0x20] sm:$0xff] %vm55, %v1027
    %1036 = vst.msk [vmem:[#allocation3 + $0x28] sm:$0xff] %vm55, %v1028
    %1037 = vst.msk [vmem:[#allocation3 + $0x30] sm:$0xff] %vm55, %v1029
    %1038 = vst.msk [vmem:[#allocation3 + $0x38] sm:$0xff] %vm55, %v1030
    %v1039 = vld [vmem:[#allocation3] ss:$2 sm:$0xff]
    %v1040 = vld [vmem:[%s212] ss:$2 sm:$0xff]
    %v1041 = vld [vmem:[%s214] ss:$2 sm:$0xff]
    %v1042 = vld [vmem:[%s216] ss:$2 sm:$0xff]
    %v1043 = vld [vmem:[%s226] ss:$2 sm:$0xff]
    %v1044 = vld [vmem:[%s228] ss:$2 sm:$0xff]
    %v1045 = vld [vmem:[%s230] ss:$2 sm:$0xff]
    %v1046 = vld [vmem:[%s232] ss:$2 sm:$0xff]
    %s1047 = scalar_lea.vmem %s3, 1
    %v1048 = vld [vmem:[%s1047] sm:$0x1]
    %v1050 = vperm.slane %v1048, 0
    %v1052 = vmul.f32 %v1039, %v1050
    %v1053 = vmul.f32 %v1040, %v1050
    %v1054 = vmul.f32 %v1041, %v1050
    %v1055 = vmul.f32 %v1042, %v1050
    %v1056 = vsel %vm55, %v1052, 0.0
    %1057 = vadd.xlane.f32.xlu0 %v1056
    %v1058 = vpop.xlane.xlu0 %1057
    %v1059 = vsel %vm55, %v1053, 0.0
    %1060 = vadd.xlane.f32.xlu0 %v1059
    %v1061 = vpop.xlane.xlu0 %1060
    %v1062 = vsel %vm55, %v1054, 0.0
    %1063 = vadd.xlane.f32.xlu0 %v1062
    %v1064 = vpop.xlane.xlu0 %1063
    %v1065 = vsel %vm55, %v1055, 0.0
    %1066 = vadd.xlane.f32.xlu0 %v1065
    %v1067 = vpop.xlane.xlu0 %1066
    %s1068 = scalar_lea.vmem %s4, 1
    %v1069 = vld [vmem:[%s1068] sm:$0x1]
    %v1071 = vperm.slane %v1069, 0
    %v1073 = vmul.f32 %v1043, %v1071
    %v1074 = vmul.f32 %v1044, %v1071
    %v1075 = vmul.f32 %v1045, %v1071
    %v1076 = vmul.f32 %v1046, %v1071
    %v1077 = vsel %vm55, %v1073, 0.0
    %1078 = vadd.xlane.f32.xlu0 %v1077
    %v1079 = vpop.xlane.xlu0 %1078
    %v1080 = vsel %vm55, %v1074, 0.0
    %1081 = vadd.xlane.f32.xlu0 %v1080
    %v1082 = vpop.xlane.xlu0 %1081
    %v1083 = vsel %vm55, %v1075, 0.0
    %1084 = vadd.xlane.f32.xlu0 %v1083
    %v1085 = vpop.xlane.xlu0 %1084
    %v1086 = vsel %vm55, %v1076, 0.0
    %1087 = vadd.xlane.f32.xlu0 %v1086
    %v1088 = vpop.xlane.xlu0 %1087
    %v1089 = vadd.f32 %v1058, %v1079
    %v1090 = vadd.f32 %v1061, %v1082
    %v1091 = vadd.f32 %v1064, %v1085
    %v1092 = vadd.f32 %v1067, %v1088
    %s1093 = sld [smem:[#allocation4 + $0x1]]
    %v1094 = vstv %s1093
    %v1095 = vadd.f32 %v1089, %v1094
    %v1096 = vadd.f32 %v1090, %v1094
    %v1097 = vadd.f32 %v1091, %v1094
    %v1098 = vadd.f32 %v1092, %v1094
    %v1099 = vmax.f32 %v1095, -30.0
    %v1100 = vmax.f32 %v1096, -30.0
    %v1101 = vmax.f32 %v1097, -30.0
    %v1102 = vmax.f32 %v1098, -30.0
    %v1103 = vmin.f32 %v1099, 30.0
    %v1104 = vmin.f32 %v1100, 30.0
    %v1105 = vmin.f32 %v1101, 30.0
    %v1106 = vmin.f32 %v1102, 30.0
    %v1107 = vsub.f32 0.0, %v1103
    %v1108 = vsub.f32 0.0, %v1104
    %v1109 = vsub.f32 0.0, %v1105
    %v1110 = vsub.f32 0.0, %v1106
    %v1111 = vmul.f32 %v1107, 1.442695
    %v1112 = vpow.pop %v1111
    %v1113 = vmul.f32 %v1108, 1.442695
    %v1114 = vpow.pop %v1113
    %v1115 = vmul.f32 %v1109, 1.442695
    %v1116 = vpow.pop %v1115
    %v1117 = vmul.f32 %v1110, 1.442695
    %v1118 = vpow.pop %v1117
    %v1119 = vadd.f32 %v1112, 1.0
    %v1120 = vadd.f32 %v1114, 1.0
    %v1121 = vadd.f32 %v1116, 1.0
    %v1122 = vadd.f32 %v1118, 1.0
    %v1123 = vrcp.pop %v1119
    %v1124 = vmul.f32 %v1119, %v1123
    %v1125 = vsub.f32 1.0, %v1124
    %v1126 = vmul.f32 %v1123, %v1125
    %v1127 = vadd.f32 %v1123, %v1126
    %vm1128 = vweird.f32 %v1119
    %vm1129 = vweird.f32 %v1123
    %vm1130 = vmor %vm1128, %vm1129
    %v1131 = vsel %vm1130, %v1123, %v1127
    %v1132 = vand.u32 2147483647, %v1119
    %vm1133 = vcmp.eq.f32.partialorder %v1132, 8.507059e+37
    %v1134 = vand.u32 %v1119, 2147483648
    %v1135 = vor.u32 1.1754944e-38, %v1134
    %v1136 = vsel %vm1133, %v1135, %v1131
    %v1137 = vmul.f32 1.0, %v1136
    %v1138 = vrcp.pop %v1120
    %v1139 = vmul.f32 %v1120, %v1138
    %v1140 = vsub.f32 1.0, %v1139
    %v1141 = vmul.f32 %v1138, %v1140
    %v1142 = vadd.f32 %v1138, %v1141
    %vm1143 = vweird.f32 %v1120
    %vm1144 = vweird.f32 %v1138
    %vm1145 = vmor %vm1143, %vm1144
    %v1146 = vsel %vm1145, %v1138, %v1142
    %v1147 = vand.u32 2147483647, %v1120
    %vm1148 = vcmp.eq.f32.partialorder %v1147, 8.507059e+37
    %v1149 = vand.u32 %v1120, 2147483648
    %v1150 = vor.u32 1.1754944e-38, %v1149
    %v1151 = vsel %vm1148, %v1150, %v1146
    %v1152 = vmul.f32 1.0, %v1151
    %v1153 = vrcp.pop %v1121
    %v1154 = vmul.f32 %v1121, %v1153
    %v1155 = vsub.f32 1.0, %v1154
    %v1156 = vmul.f32 %v1153, %v1155
    %v1157 = vadd.f32 %v1153, %v1156
    %vm1158 = vweird.f32 %v1121
    %vm1159 = vweird.f32 %v1153
    %vm1160 = vmor %vm1158, %vm1159
    %v1161 = vsel %vm1160, %v1153, %v1157
    %v1162 = vand.u32 2147483647, %v1121
    %vm1163 = vcmp.eq.f32.partialorder %v1162, 8.507059e+37
    %v1164 = vand.u32 %v1121, 2147483648
    %v1165 = vor.u32 1.1754944e-38, %v1164
    %v1166 = vsel %vm1163, %v1165, %v1161
    %v1167 = vmul.f32 1.0, %v1166
    %v1168 = vrcp.pop %v1122
    %v1169 = vmul.f32 %v1122, %v1168
    %v1170 = vsub.f32 1.0, %v1169
    %v1171 = vmul.f32 %v1168, %v1170
    %v1172 = vadd.f32 %v1168, %v1171
    %vm1173 = vweird.f32 %v1122
    %vm1174 = vweird.f32 %v1168
    %vm1175 = vmor %vm1173, %vm1174
    %v1176 = vsel %vm1175, %v1168, %v1172
    %v1177 = vand.u32 2147483647, %v1122
    %vm1178 = vcmp.eq.f32.partialorder %v1177, 8.507059e+37
    %v1179 = vand.u32 %v1122, 2147483648
    %v1180 = vor.u32 1.1754944e-38, %v1179
    %v1181 = vsel %vm1178, %v1180, %v1176
    %v1182 = vmul.f32 1.0, %v1181
    %v1183 = vadd.f32 %v1039, %v1043
    %v1184 = vadd.f32 %v1040, %v1044
    %v1185 = vadd.f32 %v1041, %v1045
    %v1186 = vadd.f32 %v1042, %v1046
    %v1187 = vmul.f32 %v1183, %v1137
    %v1188 = vmul.f32 %v1184, %v1152
    %v1189 = vmul.f32 %v1185, %v1167
    %v1190 = vmul.f32 %v1186, %v1182
    %v1191 = vmul.f32 %v1187, %v1187
    %v1192 = vmul.f32 %v1188, %v1188
    %v1193 = vsel %vm55, %v1191, 0.0
    %1194 = vadd.xlane.f32.xlu0 %v1193
    %v1195 = vpop.xlane.xlu0 %1194
    %v1196 = vsel %vm55, %v1192, 0.0
    %1197 = vadd.xlane.f32.xlu0 %v1196
    %v1198 = vpop.xlane.xlu0 %1197
    %v1199 = vpack.c.bf16 %v1187, %v1187
    %v1200 = vpack.c.bf16 %v1188, %v1188
    %v1201 = vpack.c.bf16 %v1189, %v1189
    %v1202 = vpack.c.bf16 %v1190, %v1190
    %v1205 = vunpack.c.l.b16 %v1199
    %v1206 = vunpack.c.l.b16 %v1200
    %v1207 = vpack.c.b16 %v1206, %v1205
    %v1210 = vunpack.c.l.b16 %v1201
    %v1211 = vunpack.c.l.b16 %v1202
    %v1212 = vpack.c.b16 %v1211, %v1210
    %v1214 = vsel %vm55, %v1207, 0
    %v1217 = vsel %vm55, %v1212, 0
    %1219 = vmatpush.bf16.xpose.msra.mxu0 0
    %1220 = vmatpush.bf16.xpose.msra.mxu0 0
    %1221 = vmatpush.bf16.xpose.msra.mxu0 0
    %1222 = vmatpush.bf16.xpose.msra.mxu0 0
    %1223 = vmatpush.bf16.xpose.msra.mxu0 0
    %1224 = vmatpush.bf16.xpose.msra.mxu0 0
    %1225 = vmatpush.bf16.xpose.msra.mxu0 %v1217
    %1226 = vmatpush.bf16.xpose.msra.mxu0 %v1214
    %1227 = vmatmul.bf16.gmra.mxu0 %v1214
    %v1228 = vpop.f32.mrf.mxu0
    %v1229 = vadd.f32 0.0, %v1228
    %v1230 = vpop.f32.mrf.mxu0
    %v1231 = vadd.f32 0.0, %v1230
    %1232 = vdwg.mxu0
    %v1233 = vmul.f32 %v1189, %v1189
    %v1234 = vmul.f32 %v1190, %v1190
    %v1235 = vpack.c.bf16 %v1192, %v1191
    %v1236 = vpack.c.bf16 %v1234, %v1233
    %v1238 = vsel %vm55, %v1235, 0
    %v1241 = vsel %vm55, %v1236, 0
    %1243 = vmatpush.bf16.xpose.msra.mxu0 0
    %1244 = vmatpush.bf16.xpose.msra.mxu0 0
    %1245 = vmatpush.bf16.xpose.msra.mxu0 0
    %1246 = vmatpush.bf16.xpose.msra.mxu0 0
    %1247 = vmatpush.bf16.xpose.msra.mxu0 0
    %1248 = vmatpush.bf16.xpose.msra.mxu0 0
    %1249 = vmatpush.bf16.xpose.msra.mxu0 %v1241
    %1250 = vmatpush.bf16.xpose.msra.mxu0 %v1238
    %1251 = vmatmul.bf16.gmra.mxu0 %v600
    %v1252 = vpop.f32.mrf.mxu0
    %v1253 = vadd.f32 0.0, %v1252
    %v1254 = vpop.f32.mrf.mxu0
    %1255 = vdwg.mxu0
    %v1256 = vmul.f32 %v1229, 2.0
    %v1257 = vmul.f32 %v1231, 2.0
    %v1258 = vperm.slane %v1253, 0
    %v1259 = vsub.f32 %v1258, %v1256
    %v1260 = vsub.f32 %v1258, %v1257
    %vm1261 = vcmp.lt.s32.totalorder %v637, 16
    %v1262 = vsel %vm1261, %v1259, -1e+30
    %v1263 = vsel %vm1261, %v1260, -1e+30
    %v1264 = vsel %vm55, %v1262, -inf
    %1265 = vmax.xlane.f32.xlu0 %v1264
    %v1266 = vpop.xlane.xlu0 %1265
    %v1267 = vsel %vm55, %v1263, -inf
    %1268 = vmax.xlane.f32.xlu0 %v1267
    %v1269 = vpop.xlane.xlu0 %1268
    %v1270 = vadd.f32 %v1266, %v1195
    %v1271 = vadd.f32 %v1269, %v1198
    %v1272 = vmax.f32 %v1270, 0.0
    %v1273 = vmax.f32 %v1271, 0.0
    %v1274 = vrsqrt.pop %v1272
    %v1275 = vmul.f32 %v1274, %v1272
    %v1276 = vmul.f32 %v1275, %v1274
    %v1277 = vmul.f32 0.5, %v1276
    %v1278 = vsub.f32 1.5, %v1277
    %v1279 = vmul.f32 %v1274, %v1278
    %v1280 = vmul.f32 %v1272, %v1279
    %vm1281 = vcmp.eq.f32.partialorder %v1272, inf
    %v1282 = vsel %vm1281, %v1272, %v1280
    %vm1283 = vcmp.eq.f32.partialorder %v1272, 0.0
    %v1284 = vand.u32 %v1272, 2147483648
    %v1285 = vsel %vm1283, %v1284, %v1282
    %v1286 = vrsqrt.pop %v1273
    %v1287 = vmul.f32 %v1286, %v1273
    %v1288 = vmul.f32 %v1287, %v1286
    %v1289 = vmul.f32 0.5, %v1288
    %v1290 = vsub.f32 1.5, %v1289
    %v1291 = vmul.f32 %v1286, %v1290
    %v1292 = vmul.f32 %v1273, %v1291
    %vm1293 = vcmp.eq.f32.partialorder %v1273, inf
    %v1294 = vsel %vm1293, %v1273, %v1292
    %vm1295 = vcmp.eq.f32.partialorder %v1273, 0.0
    %v1296 = vand.u32 %v1273, 2147483648
    %v1297 = vsel %vm1295, %v1296, %v1294
    %vm1298 = vcmp.ge.s32.totalorder %v637, 16
    %v1299 = vsel %vm1298, %v1259, -1e+30
    %v1300 = vsel %vm1298, %v1260, -1e+30
    %v1301 = vsel %vm55, %v1299, -inf
    %1302 = vmax.xlane.f32.xlu0 %v1301
    %v1303 = vpop.xlane.xlu0 %1302
    %v1304 = vsel %vm55, %v1300, -inf
    %1305 = vmax.xlane.f32.xlu0 %v1304
    %v1306 = vpop.xlane.xlu0 %1305
    %v1307 = vadd.f32 %v1303, %v1195
    %v1308 = vadd.f32 %v1306, %v1198
    %v1309 = vmax.f32 %v1307, 0.0
    %v1310 = vmax.f32 %v1308, 0.0
    %v1311 = vrsqrt.pop %v1309
    %v1312 = vmul.f32 %v1311, %v1309
    %v1313 = vmul.f32 %v1312, %v1311
    %v1314 = vmul.f32 0.5, %v1313
    %v1315 = vsub.f32 1.5, %v1314
    %v1316 = vmul.f32 %v1311, %v1315
    %v1317 = vmul.f32 %v1309, %v1316
    %vm1318 = vcmp.eq.f32.partialorder %v1309, inf
    %v1319 = vsel %vm1318, %v1309, %v1317
    %vm1320 = vcmp.eq.f32.partialorder %v1309, 0.0
    %v1321 = vand.u32 %v1309, 2147483648
    %v1322 = vsel %vm1320, %v1321, %v1319
    %v1323 = vrsqrt.pop %v1310
    %v1324 = vmul.f32 %v1323, %v1310
    %v1325 = vmul.f32 %v1324, %v1323
    %v1326 = vmul.f32 0.5, %v1325
    %v1327 = vsub.f32 1.5, %v1326
    %v1328 = vmul.f32 %v1323, %v1327
    %v1329 = vmul.f32 %v1310, %v1328
    %vm1330 = vcmp.eq.f32.partialorder %v1310, inf
    %v1331 = vsel %vm1330, %v1310, %v1329
    %vm1332 = vcmp.eq.f32.partialorder %v1310, 0.0
    %v1333 = vand.u32 %v1310, 2147483648
    %v1334 = vsel %vm1332, %v1333, %v1331
    %v1335 = vsub.f32 %v1285, %v1322
    %v1336 = vsub.f32 %v1297, %v1334
    %v1337 = vmul.f32 %v1335, -1.0
    %v1338 = vmul.f32 %v1336, -1.0
    %v1339 = vmin.f32 %v1337, 60.0
    %v1340 = vmin.f32 %v1338, 60.0
    %v1341 = vsub.f32 0.0, %v1137
    %v1342 = vsub.f32 0.0, %v1152
    %v1343 = vmul.f32 %v1339, 1.442695
    %v1344 = vpow.pop %v1343
    %v1345 = vmul.f32 %v1340, 1.442695
    %v1346 = vpow.pop %v1345
    %v1347 = vmul.f32 %v1341, %v1344
    %v1348 = vmul.f32 %v1342, %v1346
    %v1349 = vsel %vm893, %v1347, 0.0
    %v1350 = vsel %vm893, %v1348, 0.0
    %v1351 = vadd.f32 %v1349, %v1350
    %1352 = vadd.xlane.f32.xlu0 %v1351
    %v1353 = vpop.xlane.xlu0 %1352
    %v1354 = vrot.slane %v1353, 4
    %v1355 = vadd.f32 %v1353, %v1354
    %v1356 = vrot.slane %v1355, 2
    %v1357 = vadd.f32 %v1355, %v1356
    %v1358 = vrot.slane %v1357, 1
    %v1359 = vadd.f32 %v1357, %v1358
    %s1360 = vtos %v1359
    %v1361 = vrcp.pop 16.0
    %v1362 = vmul.f32 16.0, %v1361
    %v1363 = vsub.f32 1.0, %v1362
    %v1364 = vmul.f32 %v1361, %v1363
    %v1365 = vadd.f32 %v1361, %v1364
    %vm1366 = vweird.f32 %v1361
    %v1367 = vsel %vm1366, %v1361, %v1365
    %s1368 = vtos %v1367
    %s1369 = smul.f32 %s1360, %s1368
    %v1370 = vmul.f32 %v1137, %v1137
    %v1371 = vmul.f32 %v1152, %v1152
    %v1372 = vsel %vm893, %v1370, 0.0
    %v1373 = vsel %vm893, %v1371, 0.0
    %v1374 = vadd.f32 %v1372, %v1373
    %1375 = vadd.xlane.f32.xlu0 %v1374
    %v1376 = vpop.xlane.xlu0 %1375
    %v1377 = vrot.slane %v1376, 4
    %v1378 = vadd.f32 %v1376, %v1377
    %v1379 = vrot.slane %v1378, 2
    %v1380 = vadd.f32 %v1378, %v1379
    %v1381 = vrot.slane %v1380, 1
    %v1382 = vadd.f32 %v1380, %v1381
    %s1383 = vtos %v1382
    %v1384 = vrcp.pop 16.0
    %v1385 = vmul.f32 16.0, %v1384
    %v1386 = vsub.f32 1.0, %v1385
    %v1387 = vmul.f32 %v1384, %v1386
    %v1388 = vadd.f32 %v1384, %v1387
    %vm1389 = vweird.f32 %v1384
    %v1390 = vsel %vm1389, %v1384, %v1388
    %s1391 = vtos %v1390
    %s1392 = smul.f32 %s1383, %s1391
    %s1393 = sadd.f32 %s1369, %s1392
    %s1394 = sadd.f32 %s949, %s1393
    %1395 = vst.msk [vmem:[#allocation2] sm:$0xff] %vm55, %v1187
    %1396 = vst.msk [vmem:[#allocation2 + $0x8] sm:$0xff] %vm55, %v1188
    %1397 = vst.msk [vmem:[#allocation2 + $0x10] sm:$0xff] %vm55, %v1189
    %1398 = vst.msk [vmem:[#allocation2 + $0x18] sm:$0xff] %vm55, %v1190
    %v1399 = vld [vmem:[#allocation2] sm:$0xff]
    %v1400 = vld [vmem:[#allocation2 + $0x8] sm:$0xff]
    %v1401 = vld [vmem:[#allocation2 + $0x10] sm:$0xff]
    %v1402 = vld [vmem:[#allocation2 + $0x18] sm:$0xff]
    %s1403 = scalar_lea.vmem %s1, 64
    %v1404 = vld [vmem:[%s1403] sm:$0xff]
    %v1405 = vld [vmem:[%s1403 + $0x8] sm:$0xff]
    %v1406 = vld [vmem:[%s1403 + $0x10] sm:$0xff]
    %v1407 = vld [vmem:[%s1403 + $0x18] sm:$0xff]
    %v1408 = vpack.c.bf16 %v1405, %v1404
    %v1409 = vpack.c.bf16 %v1407, %v1406
    %v1410 = vpack.c.bf16 %v1400, %v1399
    %v1411 = vpack.c.bf16 %v1402, %v1401
    %s1412 = scalar_lea.vmem %s2, 2
    %v1413 = vld [vmem:[%s1412] sm:$0x1]
    %v1415 = vperm.slane %v1413, 0
    %v1418 = vsel %vm55, %v1410, 0
    %v1421 = vsel %vm55, %v1411, 0
    %1423 = vmatpush.bf16.msra.mxu0 0
    %1424 = vmatpush.bf16.msra.mxu0 0
    %1425 = vmatpush.bf16.msra.mxu0 0
    %1426 = vmatpush.bf16.msra.mxu0 0
    %1427 = vmatpush.bf16.msra.mxu0 0
    %1428 = vmatpush.bf16.msra.mxu0 0
    %1429 = vmatpush.bf16.msra.mxu0 %v1409
    %1430 = vmatpush.bf16.msra.mxu0 %v1408
    %1431 = vmatmul.bf16.gmra.mxu0 %v1418
    %v1432 = vpop.f32.mrf.mxu0
    %v1433 = vadd.f32 %v1415, %v1432
    %v1434 = vpop.f32.mrf.mxu0
    %v1435 = vadd.f32 %v1415, %v1434
    %1436 = vmatmul.bf16.gmra.mxu0 %v1421
    %v1437 = vpop.f32.mrf.mxu0
    %v1438 = vadd.f32 %v1415, %v1437
    %v1439 = vpop.f32.mrf.mxu0
    %v1440 = vadd.f32 %v1415, %v1439
    %1441 = vdwg.mxu0
    %v1442 = vmax.f32 %v1433, 0.0
    %v1443 = vmax.f32 %v1435, 0.0
    %v1444 = vmax.f32 %v1438, 0.0
    %v1445 = vmax.f32 %v1440, 0.0
    %1446 = vst.msk [vmem:[#allocation3] sm:$0xff] %vm55, %v1442
    %1447 = vst.msk [vmem:[#allocation3 + $0x8] sm:$0xff] %vm55, %v1443
    %1448 = vst.msk [vmem:[#allocation3 + $0x10] sm:$0xff] %vm55, %v1444
    %1449 = vst.msk [vmem:[#allocation3 + $0x18] sm:$0xff] %vm55, %v1445
    %v1450 = vld [vmem:[#allocation3] ss:$2 sm:$0xff]
    %v1451 = vld [vmem:[%s212] ss:$2 sm:$0xff]
    %v1452 = vld [vmem:[%s226] ss:$2 sm:$0xff]
    %v1453 = vld [vmem:[%s228] ss:$2 sm:$0xff]
    %s1454 = scalar_lea.vmem %s3, 2
    %v1455 = vld [vmem:[%s1454] sm:$0x1]
    %v1457 = vperm.slane %v1455, 0
    %v1459 = vmul.f32 %v1450, %v1457
    %v1460 = vmul.f32 %v1451, %v1457
    %v1461 = vsel %vm55, %v1459, 0.0
    %1462 = vadd.xlane.f32.xlu0 %v1461
    %v1463 = vpop.xlane.xlu0 %1462
    %v1464 = vsel %vm55, %v1460, 0.0
    %1465 = vadd.xlane.f32.xlu0 %v1464
    %v1466 = vpop.xlane.xlu0 %1465
    %s1467 = scalar_lea.vmem %s4, 2
    %v1468 = vld [vmem:[%s1467] sm:$0x1]
    %v1470 = vperm.slane %v1468, 0
    %v1472 = vmul.f32 %v1452, %v1470
    %v1473 = vmul.f32 %v1453, %v1470
    %v1474 = vsel %vm55, %v1472, 0.0
    %1475 = vadd.xlane.f32.xlu0 %v1474
    %v1476 = vpop.xlane.xlu0 %1475
    %v1477 = vsel %vm55, %v1473, 0.0
    %1478 = vadd.xlane.f32.xlu0 %v1477
    %v1479 = vpop.xlane.xlu0 %1478
    %v1480 = vadd.f32 %v1463, %v1476
    %v1481 = vadd.f32 %v1466, %v1479
    %s1482 = sld [smem:[#allocation4 + $0x2]]
    %v1483 = vstv %s1482
    %v1484 = vadd.f32 %v1480, %v1483
    %v1485 = vadd.f32 %v1481, %v1483
    %v1486 = vmax.f32 %v1484, -30.0
    %v1487 = vmax.f32 %v1485, -30.0
    %v1488 = vmin.f32 %v1486, 30.0
    %v1489 = vmin.f32 %v1487, 30.0
    %v1490 = vsub.f32 0.0, %v1488
    %v1491 = vsub.f32 0.0, %v1489
    %v1492 = vmul.f32 %v1490, 1.442695
    %v1493 = vpow.pop %v1492
    %v1494 = vmul.f32 %v1491, 1.442695
    %v1495 = vpow.pop %v1494
    %v1496 = vadd.f32 %v1493, 1.0
    %v1497 = vadd.f32 %v1495, 1.0
    %v1498 = vrcp.pop %v1496
    %v1499 = vmul.f32 %v1496, %v1498
    %v1500 = vsub.f32 1.0, %v1499
    %v1501 = vmul.f32 %v1498, %v1500
    %v1502 = vadd.f32 %v1498, %v1501
    %vm1503 = vweird.f32 %v1496
    %vm1504 = vweird.f32 %v1498
    %vm1505 = vmor %vm1503, %vm1504
    %v1506 = vsel %vm1505, %v1498, %v1502
    %v1507 = vand.u32 2147483647, %v1496
    %vm1508 = vcmp.eq.f32.partialorder %v1507, 8.507059e+37
    %v1509 = vand.u32 %v1496, 2147483648
    %v1510 = vor.u32 1.1754944e-38, %v1509
    %v1511 = vsel %vm1508, %v1510, %v1506
    %v1512 = vmul.f32 1.0, %v1511
    %v1513 = vrcp.pop %v1497
    %v1514 = vmul.f32 %v1497, %v1513
    %v1515 = vsub.f32 1.0, %v1514
    %v1516 = vmul.f32 %v1513, %v1515
    %v1517 = vadd.f32 %v1513, %v1516
    %vm1518 = vweird.f32 %v1497
    %vm1519 = vweird.f32 %v1513
    %vm1520 = vmor %vm1518, %vm1519
    %v1521 = vsel %vm1520, %v1513, %v1517
    %v1522 = vand.u32 2147483647, %v1497
    %vm1523 = vcmp.eq.f32.partialorder %v1522, 8.507059e+37
    %v1524 = vand.u32 %v1497, 2147483648
    %v1525 = vor.u32 1.1754944e-38, %v1524
    %v1526 = vsel %vm1523, %v1525, %v1521
    %v1527 = vmul.f32 1.0, %v1526
    %v1528 = vadd.f32 %v1450, %v1452
    %v1529 = vadd.f32 %v1451, %v1453
    %v1530 = vmul.f32 %v1528, %v1512
    %v1531 = vmul.f32 %v1529, %v1527
    %v1532 = vmul.f32 %v1530, %v1530
    %v1533 = vsel %vm55, %v1532, 0.0
    %1534 = vadd.xlane.f32.xlu0 %v1533
    %v1535 = vpop.xlane.xlu0 %1534
    %v1536 = vpack.c.bf16 %v1530, %v1530
    %v1537 = vpack.c.bf16 %v1531, %v1531
    %v1540 = vunpack.c.l.b16 %v1536
    %v1541 = vunpack.c.l.b16 %v1537
    %v1542 = vpack.c.b16 %v1541, %v1540
    %v1544 = vsel %vm55, %v1536, 0
    %v1547 = vsel %vm55, %v1542, 0
    %1549 = vmatpush.bf16.xpose.msra.mxu0 0
    %1550 = vmatpush.bf16.xpose.msra.mxu0 0
    %1551 = vmatpush.bf16.xpose.msra.mxu0 0
    %1552 = vmatpush.bf16.xpose.msra.mxu0 0
    %1553 = vmatpush.bf16.xpose.msra.mxu0 0
    %1554 = vmatpush.bf16.xpose.msra.mxu0 0
    %1555 = vmatpush.bf16.xpose.msra.mxu0 0
    %1556 = vmatpush.bf16.xpose.msra.mxu0 %v1547
    %1557 = vmatmul.bf16.gmra.mxu0 %v1544
    %v1558 = vpop.f32.mrf.mxu0
    %v1559 = vadd.f32 0.0, %v1558
    %v1560 = vpop.f32.mrf.mxu0
    %1561 = vdwg.mxu0
    %v1562 = vmul.f32 %v1531, %v1531
    %v1563 = vpack.c.bf16 %v1562, %v1532
    %v1565 = vsel %vm55, %v1563, 0
    %1567 = vmatpush.bf16.xpose.msra.mxu0 0
    %1568 = vmatpush.bf16.xpose.msra.mxu0 0
    %1569 = vmatpush.bf16.xpose.msra.mxu0 0
    %1570 = vmatpush.bf16.xpose.msra.mxu0 0
    %1571 = vmatpush.bf16.xpose.msra.mxu0 0
    %1572 = vmatpush.bf16.xpose.msra.mxu0 0
    %1573 = vmatpush.bf16.xpose.msra.mxu0 0
    %1574 = vmatpush.bf16.xpose.msra.mxu0 %v1565
    %1575 = vmatmul.bf16.gmra.mxu0 %v600
    %v1576 = vpop.f32.mrf.mxu0
    %v1577 = vadd.f32 0.0, %v1576
    %v1578 = vpop.f32.mrf.mxu0
    %1579 = vdwg.mxu0
    %v1580 = vmul.f32 %v1559, 2.0
    %v1581 = vperm.slane %v1577, 0
    %v1582 = vsub.f32 %v1581, %v1580
    %vm1583 = vcmp.lt.s32.totalorder %v637, 8
    %v1584 = vsel %vm1583, %v1582, -1e+30
    %vm1585 = vcmask 130048
    %v1586 = vsel %vm1585, %v1584, -inf
    %1587 = vmax.xlane.f32.xlu0 %v1586
    %v1588 = vpop.xlane.xlu0 %1587
    %v1589 = vadd.f32 %v1588, %v1535
    %v1590 = vmax.f32 %v1589, 0.0
    %v1591 = vrsqrt.pop %v1590
    %v1592 = vmul.f32 %v1591, %v1590
    %v1593 = vmul.f32 %v1592, %v1591
    %v1594 = vmul.f32 0.5, %v1593
    %v1595 = vsub.f32 1.5, %v1594
    %v1596 = vmul.f32 %v1591, %v1595
    %v1597 = vmul.f32 %v1590, %v1596
    %vm1598 = vcmp.eq.f32.partialorder %v1590, inf
    %v1599 = vsel %vm1598, %v1590, %v1597
    %vm1600 = vcmp.eq.f32.partialorder %v1590, 0.0
    %v1601 = vand.u32 %v1590, 2147483648
    %v1602 = vsel %vm1600, %v1601, %v1599
    %vm1603 = vcmp.ge.s32.totalorder %v637, 8
    %v1604 = vsel %vm1603, %v1582, -1e+30
    %v1605 = vsel %vm1585, %v1604, -inf
    %1606 = vmax.xlane.f32.xlu0 %v1605
    %v1607 = vpop.xlane.xlu0 %1606
    %v1608 = vadd.f32 %v1607, %v1535
    %v1609 = vmax.f32 %v1608, 0.0
    %v1610 = vrsqrt.pop %v1609
    %v1611 = vmul.f32 %v1610, %v1609
    %v1612 = vmul.f32 %v1611, %v1610
    %v1613 = vmul.f32 0.5, %v1612
    %v1614 = vsub.f32 1.5, %v1613
    %v1615 = vmul.f32 %v1610, %v1614
    %v1616 = vmul.f32 %v1609, %v1615
    %vm1617 = vcmp.eq.f32.partialorder %v1609, inf
    %v1618 = vsel %vm1617, %v1609, %v1616
    %vm1619 = vcmp.eq.f32.partialorder %v1609, 0.0
    %v1620 = vand.u32 %v1609, 2147483648
    %v1621 = vsel %vm1619, %v1620, %v1618
    %v1622 = vsub.f32 %v1602, %v1621
    %v1623 = vmul.f32 %v1622, -1.0
    %v1624 = vmin.f32 %v1623, 60.0
    %v1625 = vsub.f32 0.0, %v1512
    %v1626 = vmul.f32 %v1624, 1.442695
    %v1627 = vpow.pop %v1626
    %v1628 = vmul.f32 %v1625, %v1627
    %v1629 = vsel %vm893, %v1628, 0.0
    %1630 = vadd.xlane.f32.xlu0 %v1629
    %v1631 = vpop.xlane.xlu0 %1630
    %v1632 = vrot.slane %v1631, 4
    %v1633 = vadd.f32 %v1631, %v1632
    %v1634 = vrot.slane %v1633, 2
    %v1635 = vadd.f32 %v1633, %v1634
    %v1636 = vrot.slane %v1635, 1
    %v1637 = vadd.f32 %v1635, %v1636
    %s1638 = vtos %v1637
    %v1639 = vrcp.pop 8.0
    %v1640 = vmul.f32 8.0, %v1639
    %v1641 = vsub.f32 1.0, %v1640
    %v1642 = vmul.f32 %v1639, %v1641
    %v1643 = vadd.f32 %v1639, %v1642
    %vm1644 = vweird.f32 %v1639
    %v1645 = vsel %vm1644, %v1639, %v1643
    %s1646 = vtos %v1645
    %s1647 = smul.f32 %s1638, %s1646
    %v1648 = vmul.f32 %v1512, %v1512
    %v1649 = vsel %vm893, %v1648, 0.0
    %1650 = vadd.xlane.f32.xlu0 %v1649
    %v1651 = vpop.xlane.xlu0 %1650
    %v1652 = vrot.slane %v1651, 4
    %v1653 = vadd.f32 %v1651, %v1652
    %v1654 = vrot.slane %v1653, 2
    %v1655 = vadd.f32 %v1653, %v1654
    %v1656 = vrot.slane %v1655, 1
    %v1657 = vadd.f32 %v1655, %v1656
    %s1658 = vtos %v1657
    %v1659 = vrcp.pop 8.0
    %v1660 = vmul.f32 8.0, %v1659
    %v1661 = vsub.f32 1.0, %v1660
    %v1662 = vmul.f32 %v1659, %v1661
    %v1663 = vadd.f32 %v1659, %v1662
    %vm1664 = vweird.f32 %v1659
    %v1665 = vsel %vm1664, %v1659, %v1663
    %s1666 = vtos %v1665
    %s1667 = smul.f32 %s1658, %s1666
    %s1668 = sadd.f32 %s1647, %s1667
    %s1669 = sadd.f32 %s1394, %s1668
    %1670 = vst.msk [vmem:[#allocation2] sm:$0xff] %vm55, %v1530
    %1671 = vst.msk [vmem:[#allocation2 + $0x8] sm:$0xff] %vm55, %v1531
    %v1672 = vld [vmem:[#allocation2] sm:$0xff]
    %v1673 = vld [vmem:[#allocation2 + $0x8] sm:$0xff]
    %s1674 = scalar_lea.vmem %s1, 96
    %v1675 = vld [vmem:[%s1674] sm:$0xff]
    %v1676 = vld [vmem:[%s1674 + $0x8] sm:$0xff]
    %v1677 = vld [vmem:[%s1674 + $0x10] sm:$0xff]
    %v1678 = vld [vmem:[%s1674 + $0x18] sm:$0xff]
    %v1679 = vpack.c.bf16 %v1676, %v1675
    %v1680 = vpack.c.bf16 %v1678, %v1677
    %v1681 = vpack.c.bf16 %v1673, %v1672
    %s1682 = scalar_lea.vmem %s2, 3
    %v1683 = vld [vmem:[%s1682] sm:$0x1]
    %v1685 = vperm.slane %v1683, 0
    %v1688 = vsel %vm55, %v1681, 0
    %1690 = vmatpush.bf16.msra.mxu0 0
    %1691 = vmatpush.bf16.msra.mxu0 0
    %1692 = vmatpush.bf16.msra.mxu0 0
    %1693 = vmatpush.bf16.msra.mxu0 0
    %1694 = vmatpush.bf16.msra.mxu0 0
    %1695 = vmatpush.bf16.msra.mxu0 0
    %1696 = vmatpush.bf16.msra.mxu0 %v1680
    %1697 = vmatpush.bf16.msra.mxu0 %v1679
    %1698 = vmatmul.bf16.gmra.mxu0 %v1688
    %v1699 = vpop.f32.mrf.mxu0
    %v1700 = vadd.f32 %v1685, %v1699
    %v1701 = vpop.f32.mrf.mxu0
    %v1702 = vadd.f32 %v1685, %v1701
    %1703 = vdwg.mxu0
    %v1704 = vmax.f32 %v1700, 0.0
    %v1705 = vmax.f32 %v1702, 0.0
    %1706 = vst.msk [vmem:[#allocation3] sm:$0xff] %vm55, %v1704
    %1707 = vst.msk [vmem:[#allocation3 + $0x8] sm:$0xff] %vm55, %v1705
    %v1708 = vld [vmem:[#allocation3] ss:$2 sm:$0xff]
    %v1709 = vld [vmem:[%s226] ss:$2 sm:$0xff]
    %s1710 = scalar_lea.vmem %s3, 3
    %v1711 = vld [vmem:[%s1710] sm:$0x1]
    %v1713 = vperm.slane %v1711, 0
    %v1715 = vmul.f32 %v1708, %v1713
    %v1716 = vsel %vm55, %v1715, 0.0
    %1717 = vadd.xlane.f32.xlu0 %v1716
    %v1718 = vpop.xlane.xlu0 %1717
    %s1719 = scalar_lea.vmem %s4, 3
    %v1720 = vld [vmem:[%s1719] sm:$0x1]
    %v1722 = vperm.slane %v1720, 0
    %v1724 = vmul.f32 %v1709, %v1722
    %v1725 = vsel %vm55, %v1724, 0.0
    %1726 = vadd.xlane.f32.xlu0 %v1725
    %v1727 = vpop.xlane.xlu0 %1726
    %v1728 = vadd.f32 %v1718, %v1727
    %s1729 = sld [smem:[#allocation4 + $0x3]]
    %v1730 = vstv %s1729
    %v1731 = vadd.f32 %v1728, %v1730
    %v1732 = vmax.f32 %v1731, -30.0
    %v1733 = vmin.f32 %v1732, 30.0
    %v1734 = vsub.f32 0.0, %v1733
    %v1735 = vmul.f32 %v1734, 1.442695
    %v1736 = vpow.pop %v1735
    %v1737 = vadd.f32 %v1736, 1.0
    %v1738 = vrcp.pop %v1737
    %v1739 = vmul.f32 %v1737, %v1738
    %v1740 = vsub.f32 1.0, %v1739
    %v1741 = vmul.f32 %v1738, %v1740
    %v1742 = vadd.f32 %v1738, %v1741
    %vm1743 = vweird.f32 %v1737
    %vm1744 = vweird.f32 %v1738
    %vm1745 = vmor %vm1743, %vm1744
    %v1746 = vsel %vm1745, %v1738, %v1742
    %v1747 = vand.u32 2147483647, %v1737
    %vm1748 = vcmp.eq.f32.partialorder %v1747, 8.507059e+37
    %v1749 = vand.u32 %v1737, 2147483648
    %v1750 = vor.u32 1.1754944e-38, %v1749
    %v1751 = vsel %vm1748, %v1750, %v1746
    %v1752 = vmul.f32 1.0, %v1751
    %v1753 = vadd.f32 %v1708, %v1709
    %v1754 = vmul.f32 %v1753, %v1752
    %v1755 = vmul.f32 %v1754, %v1754
    %vm1756 = vcmask 257024
    %v1757 = vsel %vm1756, %v1755, 0.0
    %1758 = vadd.xlane.f32.xlu0 %v1757
    %v1759 = vpop.xlane.xlu0 %1758
    %v1760 = vpack.c.bf16 %v1754, %v1754
    %v1762 = vsel %vm55, %v1760, 0
    %1764 = vmatpush.bf16.xpose.msra.mxu0 0
    %1765 = vmatpush.bf16.xpose.msra.mxu0 0
    %1766 = vmatpush.bf16.xpose.msra.mxu0 0
    %1767 = vmatpush.bf16.xpose.msra.mxu0 0
    %1768 = vmatpush.bf16.xpose.msra.mxu0 0
    %1769 = vmatpush.bf16.xpose.msra.mxu0 0
    %1770 = vmatpush.bf16.xpose.msra.mxu0 0
    %1771 = vmatpush.bf16.xpose.msra.mxu0 %v1762
    %1772 = vmatmul.bf16.gmra.mxu0 %v1762
    %v1773 = vpop.f32.mrf.mxu0
    %v1774 = vadd.f32 0.0, %v1773
    %v1775 = vpop.f32.mrf.mxu0
    %1776 = vdwg.mxu0
    %v1777 = vpack.c.bf16 %v1755, %v1755
    %v1779 = vsel %vm55, %v1777, 0
    %1781 = vmatpush.bf16.xpose.msra.mxu0 0
    %1782 = vmatpush.bf16.xpose.msra.mxu0 0
    %1783 = vmatpush.bf16.xpose.msra.mxu0 0
    %1784 = vmatpush.bf16.xpose.msra.mxu0 0
    %1785 = vmatpush.bf16.xpose.msra.mxu0 0
    %1786 = vmatpush.bf16.xpose.msra.mxu0 0
    %1787 = vmatpush.bf16.xpose.msra.mxu0 0
    %1788 = vmatpush.bf16.xpose.msra.mxu0 %v1779
    %1789 = vmatmul.bf16.gmra.mxu0 %v600
    %v1790 = vpop.f32.mrf.mxu0
    %v1791 = vadd.f32 0.0, %v1790
    %v1792 = vpop.f32.mrf.mxu0
    %1793 = vdwg.mxu0
    %v1794 = vmul.f32 %v1774, 2.0
    %v1795 = vperm.slane %v1791, 0
    %v1796 = vsub.f32 %v1795, %v1794
    %vm1797 = vcmp.lt.s32.totalorder %v637, 4
    %v1798 = vsel %vm1797, %v1796, -1e+30
    %vm1799 = vcmask 60416
    %v1800 = vsel %vm1799, %v1798, -inf
    %1801 = vmax.xlane.f32.xlu0 %v1800
    %v1802 = vpop.xlane.xlu0 %1801
    %v1803 = vadd.f32 %v1802, %v1759
    %v1804 = vmax.f32 %v1803, 0.0
    %v1805 = vrsqrt.pop %v1804
    %v1806 = vmul.f32 %v1805, %v1804
    %v1807 = vmul.f32 %v1806, %v1805
    %v1808 = vmul.f32 0.5, %v1807
    %v1809 = vsub.f32 1.5, %v1808
    %v1810 = vmul.f32 %v1805, %v1809
    %v1811 = vmul.f32 %v1804, %v1810
    %vm1812 = vcmp.eq.f32.partialorder %v1804, inf
    %v1813 = vsel %vm1812, %v1804, %v1811
    %vm1814 = vcmp.eq.f32.partialorder %v1804, 0.0
    %v1815 = vand.u32 %v1804, 2147483648
    %v1816 = vsel %vm1814, %v1815, %v1813
    %vm1817 = vcmp.ge.s32.totalorder %v637, 4
    %v1818 = vsel %vm1817, %v1796, -1e+30
    %v1819 = vsel %vm1799, %v1818, -inf
    %1820 = vmax.xlane.f32.xlu0 %v1819
    %v1821 = vpop.xlane.xlu0 %1820
    %v1822 = vadd.f32 %v1821, %v1759
    %v1823 = vmax.f32 %v1822, 0.0
    %v1824 = vrsqrt.pop %v1823
    %v1825 = vmul.f32 %v1824, %v1823
    %v1826 = vmul.f32 %v1825, %v1824
    %v1827 = vmul.f32 0.5, %v1826
    %v1828 = vsub.f32 1.5, %v1827
    %v1829 = vmul.f32 %v1824, %v1828
    %v1830 = vmul.f32 %v1823, %v1829
    %vm1831 = vcmp.eq.f32.partialorder %v1823, inf
    %v1832 = vsel %vm1831, %v1823, %v1830
    %vm1833 = vcmp.eq.f32.partialorder %v1823, 0.0
    %v1834 = vand.u32 %v1823, 2147483648
    %v1835 = vsel %vm1833, %v1834, %v1832
    %v1836 = vsub.f32 %v1816, %v1835
    %v1837 = vmul.f32 %v1836, -1.0
    %v1838 = vmin.f32 %v1837, 60.0
    %v1839 = vsub.f32 0.0, %v1752
    %v1840 = vmul.f32 %v1838, 1.442695
    %v1841 = vpow.pop %v1840
    %v1842 = vmul.f32 %v1839, %v1841
    %vm1843 = vcmask 3072
    %v1844 = vsel %vm1843, %v1842, 0.0
    %1845 = vadd.xlane.f32.xlu0 %v1844
    %v1846 = vpop.xlane.xlu0 %1845
    %v1847 = vrot.slane %v1846, 4
    %v1848 = vadd.f32 %v1846, %v1847
    %v1849 = vrot.slane %v1848, 2
    %v1850 = vadd.f32 %v1848, %v1849
    %v1851 = vrot.slane %v1850, 1
    %v1852 = vadd.f32 %v1850, %v1851
    %s1853 = vtos %v1852
    %v1854 = vrcp.pop 4.0
    %v1855 = vmul.f32 4.0, %v1854
    %v1856 = vsub.f32 1.0, %v1855
    %v1857 = vmul.f32 %v1854, %v1856
    %v1858 = vadd.f32 %v1854, %v1857
    %vm1859 = vweird.f32 %v1854
    %v1860 = vsel %vm1859, %v1854, %v1858
    %s1861 = vtos %v1860
    %s1862 = smul.f32 %s1853, %s1861
    %v1863 = vmul.f32 %v1752, %v1752
    %v1864 = vsel %vm1843, %v1863, 0.0
    %1865 = vadd.xlane.f32.xlu0 %v1864
    %v1866 = vpop.xlane.xlu0 %1865
    %v1867 = vrot.slane %v1866, 4
    %v1868 = vadd.f32 %v1866, %v1867
    %v1869 = vrot.slane %v1868, 2
    %v1870 = vadd.f32 %v1868, %v1869
    %v1871 = vrot.slane %v1870, 1
    %v1872 = vadd.f32 %v1870, %v1871
    %s1873 = vtos %v1872
    %v1874 = vrcp.pop 4.0
    %v1875 = vmul.f32 4.0, %v1874
    %v1876 = vsub.f32 1.0, %v1875
    %v1877 = vmul.f32 %v1874, %v1876
    %v1878 = vadd.f32 %v1874, %v1877
    %vm1879 = vweird.f32 %v1874
    %v1880 = vsel %vm1879, %v1874, %v1878
    %s1881 = vtos %v1880
    %s1882 = smul.f32 %s1873, %s1881
    %s1883 = sadd.f32 %s1862, %s1882
    %s1884 = sadd.f32 %s1669, %s1883
    %v1885 = vrcp.pop 3.0
    %v1886 = vmul.f32 3.0, %v1885
    %v1887 = vsub.f32 1.0, %v1886
    %v1888 = vmul.f32 %v1885, %v1887
    %v1889 = vadd.f32 %v1885, %v1888
    %vm1890 = vweird.f32 %v1885
    %v1891 = vsel %vm1890, %v1885, %v1889
    %s1892 = vtos %v1891
    %s1893 = smul.f32 %s1884, %s1892
    %s1894 = scalar_lea.smem [#allocation7], 0
    %1895 = sst [smem:[%s1894]] %s1893
    // Predicated region
    $region30: #{tpu_custom_call.1} parent=1 // pred_check
      _
    $region31: #{tpu_custom_call.1} parent=1 // pred_check_branch
      %1897 = sbr.rel (0) target = $region33
    $region32: #{tpu_custom_call.1} parent=1 // pred_region
      %1899 = vsyncadd [#allocation5], 0
      %s1901 = sshll.u32 %s6, 4
      %s1902 = int_to_ptr.hbm [resolvable:$true] %s1901
      %1904 = dma.smem_to_hbm [#allocation7], 16, %s1902, [#allocation5]
    $region33: #{tpu_custom_call.1} parent=1 // pred_fallthru
      _
    // Predicated region
    $region34: #{tpu_custom_call.1} parent=1 // pred_check
      _
    $region35: #{tpu_custom_call.1} parent=1 // pred_check_branch
      %1906 = sbr.rel (0) target = $region37
    $region36: #{tpu_custom_call.1} parent=1 // pred_region
      %1908 = dma.done [#allocation5], 16
    $region37: #{tpu_custom_call.1} parent=1 // pred_fallthru
      _
    %1909 = sfence
    %1910 = vsyncpa [#allocation5], 1
    %1911 = vsyncpa [#allocation6], 1

</llo_original>
